<compile_context>
chip_gen: v6e
topology: v6e:2x2x1
jax: 0.10.0
libtpu: 0.0.40
codegen_flags: <defaults>
</compile_context>

<pallas_src>
import jax
import jax.numpy as jnp
from jax import lax
from jax.experimental import pallas as pl
from jax.experimental.pallas import tpu as pltpu

LANES = 128
R = 2                       # query-lane batching: N = R*128 per MXU matmul
NW = R * LANES              # 256 query lanes per kernel row
ROWS_PER_BLOCK = 256        # rows per grid step (each row = NW queries)


def _round_up(x, m):
    return ((x + m - 1) // m) * m


def laplacian_kernel(gxy_ref, coef_ref, tex_ref, o_ref):
    """One grid step: samples r_blk * NW query points against all 4 levels.

    gxy_ref : (r_blk, 2*NW)  lanes [0,NW) = raw grid-x, [NW,2NW) = raw grid-y
    coef_ref: (KPAD, 4*NW)   lane-tiled [scale2_w | local_w | scale2_h | local_h]
    tex_ref : (KPAD, KPAD)   block-diagonal packed textures (zeros elsewhere)
    o_ref   : (r_blk, NW)    summed bilinear samples
    """
    r_blk, nw = o_ref.shape

    tex = tex_ref[...]                                      # loop-invariant
    row_ids = lax.broadcasted_iota(jnp.int32, (8, nw), 0)   # hoisted constant

    def group(g, carry):
        base = pl.multiple_of(g * 8, 8)                     # sublane-aligned
        tile = jnp.zeros((8, nw), jnp.float32)
        for r8 in range(8):                                 # static 8-row unroll
            r = base + r8
            gx = gxy_ref[pl.ds(r, 1), 0:nw]                 # (1, nw) raw grid-x
            gy = gxy_ref[pl.ds(r, 1), nw:2 * nw]            # (1, nw) raw grid-y
            # Separable bilinear "hat" weights for ALL pyramid levels at once
            # (each level's taps occupy a contiguous sublane band).
            # scale2 = (dim-1) folds the x*2-1 / +1 affine transform and
            # encodes align_corners=True; out-of-range & padded taps get
            # weight 0 == padding_mode='zeros'.
            wx = jnp.maximum(
                0.0, 1.0 - jnp.abs(gx * coef_ref[:, 0:nw]
                                   - coef_ref[:, nw:2 * nw]))       # (KPAD, nw)
            wy = jnp.maximum(
                0.0, 1.0 - jnp.abs(gy * coef_ref[:, 2 * nw:3 * nw]
                                   - coef_ref[:, 3 * nw:4 * nw]))   # (KPAD, nw)
            # Width contraction of all 4 levels in one MXU matmul (N = nw),
            # height+level contraction as fused mul + sublane reduce.
            tmp = jnp.dot(tex, wx, preferred_element_type=jnp.float32)
            red = jnp.sum(wy * tmp, axis=0, keepdims=True)          # (1, nw)
            # Place this row at sublane r8 of the output tile (select, no
            # per-row masked stores).
            tile = jnp.where(row_ids == r8, red, tile)
        # One unmasked, sublane-aligned (8, nw) store per 8 rows.
        o_ref[pl.ds(base, 8), :] = tile
        return carry

    lax.fori_loop(0, r_blk // 8, group, 0)


def laplacian_pyramid_forward(x, layers):
    """x: (N, Hg, Wg, 2) sampling grid in [0,1]; layers: 4 params (1,1,Hk,Wk).

    Returns (N, 1, Hg, Wg) float32, matching the PyTorch module output.
    """
    N, Hg, Wg, _ = x.shape
    Q = N * Hg * Wg

    # ---- lane-dense query layout: (rows, NW), query index on the lane axis --
    rows = -(-Q // NW)
    rows8 = _round_up(rows, 8)
    r_blk = min(ROWS_PER_BLOCK, rows8)
    # v7x has 2 TensorCores: ensure the "parallel" grid has >= 2 steps
    # whenever there is enough work to split (no-op cost on v5e/v6e).
    if rows8 // r_blk < 2 and rows8 >= 16:
        r_blk = _round_up(-(-rows8 // 2), 8)
    rows_pad = _round_up(rows8, r_blk)
    grid = rows_pad // r_blk
    qpad = rows_pad * NW

    g = x.reshape(Q, 2).astype(jnp.float32)
    g = jnp.pad(g, ((0, qpad - Q), (0, 0)))      # padded tail: harmless, sliced off
    gxr = g[:, 0].reshape(rows_pad, NW)
    gyr = g[:, 1].reshape(rows_pad, NW)
    gxy = jnp.concatenate([gxr, gyr], axis=1)    # (rows_pad, 2*NW): one DMA / step

    # ---- pack the 4 pyramid levels into one block-diagonal matrix -----------
    # grid_sample: grid x indexes the param's LAST dim, grid y its dim -2.
    texs = [l.reshape(l.shape[-2], l.shape[-1]).astype(jnp.float32) for l in layers]
    hs = [t.shape[0] for t in texs]
    ws = [t.shape[1] for t in texs]
    kpad = _round_up(max(sum(hs), sum(ws)), 8)

    tpack = jnp.zeros((kpad, kpad), jnp.float32)
    scale2_w = jnp.zeros((kpad,), jnp.float32)        # padded taps -> weight 0
    local_w = jnp.full((kpad,), 2.0, jnp.float32)
    scale2_h = jnp.zeros((kpad,), jnp.float32)
    local_h = jnp.full((kpad,), 2.0, jnp.float32)
    oh = ow = 0
    for t, hl, wl in zip(texs, hs, ws):
        tpack = tpack.at[oh:oh + hl, ow:ow + wl].set(t)
        scale2_w = scale2_w.at[ow:ow + wl].set(float(wl - 1))
        local_w = local_w.at[ow:ow + wl].set(jnp.arange(wl, dtype=jnp.float32))
        scale2_h = scale2_h.at[oh:oh + hl].set(float(hl - 1))
        local_h = local_h.at[oh:oh + hl].set(jnp.arange(hl, dtype=jnp.float32))
        oh += hl
        ow += wl

    # Pre-tile to lane width host-side: no per-iteration broadcasts in-kernel.
    coef = jnp.concatenate(
        [jnp.broadcast_to(c[:, None], (kpad, NW))
         for c in (scale2_w, local_w, scale2_h, local_h)], axis=1)  # (kpad, 4*NW)

    out = pl.pallas_call(
        laplacian_kernel,
        out_shape=jax.ShapeDtypeStruct((rows_pad, NW), jnp.float32),
        grid_spec=pltpu.PrefetchScalarGridSpec(
            num_scalar_prefetch=0,
            grid=(grid,),
            in_specs=[
                pl.BlockSpec((r_blk, 2 * NW), lambda i: (i, 0)),   # gxy
                pl.BlockSpec((kpad, 4 * NW), lambda i: (0, 0)),    # coef (invariant)
                pl.BlockSpec((kpad, kpad), lambda i: (0, 0)),      # packed textures
            ],
            out_specs=pl.BlockSpec((r_blk, NW), lambda i: (i, 0)),
        ),
        compiler_params=pltpu.CompilerParams(
            dimension_semantics=("parallel",)),
    )(gxy, coef, tpack)

    out = out.reshape(-1)[:Q].reshape(N, Hg, Wg)
    return out[:, None, :, :]  # NCHW, C=1


# ---------------- pure-JAX reference (floor-based bilinear) ----------------
def _ref_grid_sample(tex, gx, gy):
    Hin, Win = tex.shape
    ix = (gx + 1.0) * 0.5 * (Win - 1)
    iy = (gy + 1.0) * 0.5 * (Hin - 1)
    x0 = jnp.floor(ix)
    y0 = jnp.floor(iy)
    x1 = x0 + 1.0
    y1 = y0 + 1.0

    def gather(yy, xx):
        valid = (xx >= 0) & (xx <= Win - 1) & (yy >= 0) & (yy <= Hin - 1)
        xi = jnp.clip(xx, 0, Win - 1).astype(jnp.int32)
        yi = jnp.clip(yy, 0, Hin - 1).astype(jnp.int32)
        return jnp.where(valid, tex[yi, xi], 0.0)

    wx1 = ix - x0
    wx0 = 1.0 - wx1
    wy1 = iy - y0
    wy0 = 1.0 - wy1
    return (gather(y0, x0) * wy0 * wx0 + gather(y0, x1) * wy0 * wx1 +
            gather(y1, x0) * wy1 * wx0 + gather(y1, x1) * wy1 * wx1)


def reference_forward(x, layers):
    N, Hg, Wg, _ = x.shape
    g = x.reshape(-1, 2).astype(jnp.float32) * 2.0 - 1.0
    gx, gy = g[:, 0], g[:, 1]
    total = jnp.zeros((N * Hg * Wg,), jnp.float32)
    for l in layers:
        total = total + _ref_grid_sample(l[0, 0].astype(jnp.float32), gx, gy)
    return total.reshape(N, Hg, Wg)[:, None, :, :]


if __name__ == "__main__":
    key = jax.random.PRNGKey(0)
    W, H = 16, 16                  # texture (parameter) spatial size
    N, Hg, Wg = 2, 8, 8            # batch and sampling-grid size

    k1, k2, k3, k4, kx = jax.random.split(key, 5)
    # Deterministic synthetic parameters (module init is zeros; use normals so
    # the output is non-trivial).
    layer1 = jax.random.normal(k1, (1, 1, W, H), jnp.float32)
    layer2 = jax.random.normal(k2, (1, 1, W // 2, H // 2), jnp.float32)
    layer3 = jax.random.normal(k3, (1, 1, W // 4, H // 4), jnp.float32)
    layer4 = jax.random.normal(k4, (1, 1, W // 8, H // 8), jnp.float32)
    layers = [layer1, layer2, layer3, layer4]

    # Sampling grid in [0,1] (forward maps it to [-1,1] via x*2-1).
    x = jax.random.uniform(kx, (N, Hg, Wg, 2), jnp.float32)

    y = laplacian_pyramid_forward(x, layers)
    jax.block_until_ready(y)

    y_ref = reference_forward(x, layers)
    err = float(jnp.max(jnp.abs(y - y_ref)))
    assert y.shape == (N, 1, Hg, Wg), y.shape
    assert err < 1e-4, f"max abs error {err}"
    print("KERNEL_OK")
</pallas_src>

<mosaic_0001>
module attributes {stable_mosaic.version = 11 : i64} {
  func.func @laplacian_kernel(%arg0: i32, %arg1: memref<8x512xf32, #tpu.memory_space<vmem>>, %arg2: memref<32x1024xf32, #tpu.memory_space<vmem>>, %arg3: memref<32x32xf32, #tpu.memory_space<vmem>>, %arg4: memref<8x256xf32, #tpu.memory_space<vmem>>) attributes {dimension_semantics = [#tpu.dimension_semantics<parallel>], iteration_bounds = array<i64: 1>, scalar_prefetch = 0 : i64, scratch_operands = 0 : i64, tpu.core_type = #tpu.core_type<tc>, window_params = [{transform_indices = @transform_0, window_bounds = array<i64: 8, 512>}, {pipeline_mode = #tpu.pipeline_mode<synchronous>, transform_indices = @transform_1, window_bounds = array<i64: 32, 1024>}, {pipeline_mode = #tpu.pipeline_mode<synchronous>, transform_indices = @transform_2, window_bounds = array<i64: 32, 32>}, {transform_indices = @transform_3, window_bounds = array<i64: 8, 256>}]} {
    %c0 = arith.constant 0 : index
    %c0_0 = arith.constant 0 : index
    %0 = vector.load %arg3[%c0, %c0_0] : memref<32x32xf32, #tpu.memory_space<vmem>>, vector<32x32xf32>
    %1 = tpu.iota {dimensions = array<i32: 0>} : vector<8x256xi32>
    %c0_i32 = arith.constant 0 : i32
    %c8_i32 = arith.constant 8 : i32
    %2 = arith.muli %c0_i32, %c8_i32 : i32
    %3 = tpu.assume_multiple %2, 8 : i32
    %cst = arith.constant 0.000000e+00 : f32
    %4 = vector.broadcast %cst : f32 to vector<8x256xf32>
    %c0_i32_1 = arith.constant 0 : i32
    %5 = arith.addi %3, %c0_i32_1 : i32
    %6 = arith.index_cast %5 : i32 to index
    %c0_2 = arith.constant 0 : index
    %7 = vector.load %arg1[%6, %c0_2] : memref<8x512xf32, #tpu.memory_space<vmem>>, vector<1x256xf32>
    %8 = arith.index_cast %5 : i32 to index
    %c256 = arith.constant 256 : index
    %9 = vector.load %arg1[%8, %c256] : memref<8x512xf32, #tpu.memory_space<vmem>>, vector<1x256xf32>
    %c0_3 = arith.constant 0 : index
    %c0_4 = arith.constant 0 : index
    %10 = vector.load %arg2[%c0_3, %c0_4] : memref<32x1024xf32, #tpu.memory_space<vmem>>, vector<32x256xf32>
    %11 = vector.broadcast %7 : vector<1x256xf32> to vector<32x256xf32>
    %12 = arith.mulf %11, %10 : vector<32x256xf32>
    %c0_5 = arith.constant 0 : index
    %c256_6 = arith.constant 256 : index
    %13 = vector.load %arg2[%c0_5, %c256_6] : memref<32x1024xf32, #tpu.memory_space<vmem>>, vector<32x256xf32>
    %14 = arith.subf %12, %13 : vector<32x256xf32>
    %15 = math.absf %14 : vector<32x256xf32>
    %cst_7 = arith.constant 1.000000e+00 : f32
    %16 = vector.broadcast %cst_7 : f32 to vector<32x256xf32>
    %17 = arith.subf %16, %15 : vector<32x256xf32>
    %cst_8 = arith.constant 0.000000e+00 : f32
    %18 = vector.broadcast %cst_8 : f32 to vector<32x256xf32>
    %19 = arith.maximumf %18, %17 : vector<32x256xf32>
    %c0_9 = arith.constant 0 : index
    %c512 = arith.constant 512 : index
    %20 = vector.load %arg2[%c0_9, %c512] : memref<32x1024xf32, #tpu.memory_space<vmem>>, vector<32x256xf32>
    %21 = vector.broadcast %9 : vector<1x256xf32> to vector<32x256xf32>
    %22 = arith.mulf %21, %20 : vector<32x256xf32>
    %c0_10 = arith.constant 0 : index
    %c768 = arith.constant 768 : index
    %23 = vector.load %arg2[%c0_10, %c768] : memref<32x1024xf32, #tpu.memory_space<vmem>>, vector<32x256xf32>
    %24 = arith.subf %22, %23 : vector<32x256xf32>
    %25 = math.absf %24 : vector<32x256xf32>
    %cst_11 = arith.constant 1.000000e+00 : f32
    %26 = vector.broadcast %cst_11 : f32 to vector<32x256xf32>
    %27 = arith.subf %26, %25 : vector<32x256xf32>
    %cst_12 = arith.constant 0.000000e+00 : f32
    %28 = vector.broadcast %cst_12 : f32 to vector<32x256xf32>
    %29 = arith.maximumf %28, %27 : vector<32x256xf32>
    %cst_13 = arith.constant dense<0.000000e+00> : vector<32x256xf32>
    %30 = tpu.matmul %0, %19, %cst_13 {dimension_numbers = #tpu.dot_dimension_numbers<[1], [0], [0], [1], [0, 0, 1, 1], [], []>} : vector<32x32xf32>, vector<32x256xf32>, vector<32x256xf32> -> vector<32x256xf32>
    %31 = arith.mulf %29, %30 : vector<32x256xf32>
    %cst_14 = arith.constant dense<0.000000e+00> : vector<256xf32>
    %32 = vector.multi_reduction <add>, %31, %cst_14 [0] : vector<32x256xf32> to vector<256xf32>
    %33 = vector.shape_cast %32 : vector<256xf32> to vector<1x256xf32>
    %c0_i32_15 = arith.constant 0 : i32
    %34 = vector.broadcast %c0_i32_15 : i32 to vector<8x256xi32>
    %35 = arith.cmpi eq, %1, %34 : vector<8x256xi32>
    %36 = vector.shape_cast %33 : vector<1x256xf32> to vector<1x256xf32>
    %37 = vector.broadcast %36 : vector<1x256xf32> to vector<8x256xf32>
    %38 = arith.select %35, %37, %4 : vector<8x256xi1>, vector<8x256xf32>
    %c1_i32 = arith.constant 1 : i32
    %39 = arith.addi %3, %c1_i32 : i32
    %40 = arith.index_cast %39 : i32 to index
    %c0_16 = arith.constant 0 : index
    %41 = vector.load %arg1[%40, %c0_16] : memref<8x512xf32, #tpu.memory_space<vmem>>, vector<1x256xf32>
    %42 = arith.index_cast %39 : i32 to index
    %c256_17 = arith.constant 256 : index
    %43 = vector.load %arg1[%42, %c256_17] : memref<8x512xf32, #tpu.memory_space<vmem>>, vector<1x256xf32>
    %c0_18 = arith.constant 0 : index
    %c0_19 = arith.constant 0 : index
    %44 = vector.load %arg2[%c0_18, %c0_19] : memref<32x1024xf32, #tpu.memory_space<vmem>>, vector<32x256xf32>
    %45 = vector.broadcast %41 : vector<1x256xf32> to vector<32x256xf32>
    %46 = arith.mulf %45, %44 : vector<32x256xf32>
    %c0_20 = arith.constant 0 : index
    %c256_21 = arith.constant 256 : index
    %47 = vector.load %arg2[%c0_20, %c256_21] : memref<32x1024xf32, #tpu.memory_space<vmem>>, vector<32x256xf32>
    %48 = arith.subf %46, %47 : vector<32x256xf32>
    %49 = math.absf %48 : vector<32x256xf32>
    %cst_22 = arith.constant 1.000000e+00 : f32
    %50 = vector.broadcast %cst_22 : f32 to vector<32x256xf32>
    %51 = arith.subf %50, %49 : vector<32x256xf32>
    %cst_23 = arith.constant 0.000000e+00 : f32
    %52 = vector.broadcast %cst_23 : f32 to vector<32x256xf32>
    %53 = arith.maximumf %52, %51 : vector<32x256xf32>
    %c0_24 = arith.constant 0 : index
    %c512_25 = arith.constant 512 : index
    %54 = vector.load %arg2[%c0_24, %c512_25] : memref<32x1024xf32, #tpu.memory_space<vmem>>, vector<32x256xf32>
    %55 = vector.broadcast %43 : vector<1x256xf32> to vector<32x256xf32>
    %56 = arith.mulf %55, %54 : vector<32x256xf32>
    %c0_26 = arith.constant 0 : index
    %c768_27 = arith.constant 768 : index
    %57 = vector.load %arg2[%c0_26, %c768_27] : memref<32x1024xf32, #tpu.memory_space<vmem>>, vector<32x256xf32>
    %58 = arith.subf %56, %57 : vector<32x256xf32>
    %59 = math.absf %58 : vector<32x256xf32>
    %cst_28 = arith.constant 1.000000e+00 : f32
    %60 = vector.broadcast %cst_28 : f32 to vector<32x256xf32>
    %61 = arith.subf %60, %59 : vector<32x256xf32>
    %cst_29 = arith.constant 0.000000e+00 : f32
    %62 = vector.broadcast %cst_29 : f32 to vector<32x256xf32>
    %63 = arith.maximumf %62, %61 : vector<32x256xf32>
    %cst_30 = arith.constant dense<0.000000e+00> : vector<32x256xf32>
    %64 = tpu.matmul %0, %53, %cst_30 {dimension_numbers = #tpu.dot_dimension_numbers<[1], [0], [0], [1], [0, 0, 1, 1], [], []>} : vector<32x32xf32>, vector<32x256xf32>, vector<32x256xf32> -> vector<32x256xf32>
    %65 = arith.mulf %63, %64 : vector<32x256xf32>
    %cst_31 = arith.constant dense<0.000000e+00> : vector<256xf32>
    %66 = vector.multi_reduction <add>, %65, %cst_31 [0] : vector<32x256xf32> to vector<256xf32>
    %67 = vector.shape_cast %66 : vector<256xf32> to vector<1x256xf32>
    %c1_i32_32 = arith.constant 1 : i32
    %68 = vector.broadcast %c1_i32_32 : i32 to vector<8x256xi32>
    %69 = arith.cmpi eq, %1, %68 : vector<8x256xi32>
    %70 = vector.shape_cast %67 : vector<1x256xf32> to vector<1x256xf32>
    %71 = vector.broadcast %70 : vector<1x256xf32> to vector<8x256xf32>
    %72 = arith.select %69, %71, %38 : vector<8x256xi1>, vector<8x256xf32>
    %c2_i32 = arith.constant 2 : i32
    %73 = arith.addi %3, %c2_i32 : i32
    %74 = arith.index_cast %73 : i32 to index
    %c0_33 = arith.constant 0 : index
    %75 = vector.load %arg1[%74, %c0_33] : memref<8x512xf32, #tpu.memory_space<vmem>>, vector<1x256xf32>
    %76 = arith.index_cast %73 : i32 to index
    %c256_34 = arith.constant 256 : index
    %77 = vector.load %arg1[%76, %c256_34] : memref<8x512xf32, #tpu.memory_space<vmem>>, vector<1x256xf32>
    %c0_35 = arith.constant 0 : index
    %c0_36 = arith.constant 0 : index
    %78 = vector.load %arg2[%c0_35, %c0_36] : memref<32x1024xf32, #tpu.memory_space<vmem>>, vector<32x256xf32>
    %79 = vector.broadcast %75 : vector<1x256xf32> to vector<32x256xf32>
    %80 = arith.mulf %79, %78 : vector<32x256xf32>
    %c0_37 = arith.constant 0 : index
    %c256_38 = arith.constant 256 : index
    %81 = vector.load %arg2[%c0_37, %c256_38] : memref<32x1024xf32, #tpu.memory_space<vmem>>, vector<32x256xf32>
    %82 = arith.subf %80, %81 : vector<32x256xf32>
    %83 = math.absf %82 : vector<32x256xf32>
    %cst_39 = arith.constant 1.000000e+00 : f32
    %84 = vector.broadcast %cst_39 : f32 to vector<32x256xf32>
    %85 = arith.subf %84, %83 : vector<32x256xf32>
    %cst_40 = arith.constant 0.000000e+00 : f32
    %86 = vector.broadcast %cst_40 : f32 to vector<32x256xf32>
    %87 = arith.maximumf %86, %85 : vector<32x256xf32>
    %c0_41 = arith.constant 0 : index
    %c512_42 = arith.constant 512 : index
    %88 = vector.load %arg2[%c0_41, %c512_42] : memref<32x1024xf32, #tpu.memory_space<vmem>>, vector<32x256xf32>
    %89 = vector.broadcast %77 : vector<1x256xf32> to vector<32x256xf32>
    %90 = arith.mulf %89, %88 : vector<32x256xf32>
    %c0_43 = arith.constant 0 : index
    %c768_44 = arith.constant 768 : index
    %91 = vector.load %arg2[%c0_43, %c768_44] : memref<32x1024xf32, #tpu.memory_space<vmem>>, vector<32x256xf32>
    %92 = arith.subf %90, %91 : vector<32x256xf32>
    %93 = math.absf %92 : vector<32x256xf32>
    %cst_45 = arith.constant 1.000000e+00 : f32
    %94 = vector.broadcast %cst_45 : f32 to vector<32x256xf32>
    %95 = arith.subf %94, %93 : vector<32x256xf32>
    %cst_46 = arith.constant 0.000000e+00 : f32
    %96 = vector.broadcast %cst_46 : f32 to vector<32x256xf32>
    %97 = arith.maximumf %96, %95 : vector<32x256xf32>
    %cst_47 = arith.constant dense<0.000000e+00> : vector<32x256xf32>
    %98 = tpu.matmul %0, %87, %cst_47 {dimension_numbers = #tpu.dot_dimension_numbers<[1], [0], [0], [1], [0, 0, 1, 1], [], []>} : vector<32x32xf32>, vector<32x256xf32>, vector<32x256xf32> -> vector<32x256xf32>
    %99 = arith.mulf %97, %98 : vector<32x256xf32>
    %cst_48 = arith.constant dense<0.000000e+00> : vector<256xf32>
    %100 = vector.multi_reduction <add>, %99, %cst_48 [0] : vector<32x256xf32> to vector<256xf32>
    %101 = vector.shape_cast %100 : vector<256xf32> to vector<1x256xf32>
    %c2_i32_49 = arith.constant 2 : i32
    %102 = vector.broadcast %c2_i32_49 : i32 to vector<8x256xi32>
    %103 = arith.cmpi eq, %1, %102 : vector<8x256xi32>
    %104 = vector.shape_cast %101 : vector<1x256xf32> to vector<1x256xf32>
    %105 = vector.broadcast %104 : vector<1x256xf32> to vector<8x256xf32>
    %106 = arith.select %103, %105, %72 : vector<8x256xi1>, vector<8x256xf32>
    %c3_i32 = arith.constant 3 : i32
    %107 = arith.addi %3, %c3_i32 : i32
    %108 = arith.index_cast %107 : i32 to index
    %c0_50 = arith.constant 0 : index
    %109 = vector.load %arg1[%108, %c0_50] : memref<8x512xf32, #tpu.memory_space<vmem>>, vector<1x256xf32>
    %110 = arith.index_cast %107 : i32 to index
    %c256_51 = arith.constant 256 : index
    %111 = vector.load %arg1[%110, %c256_51] : memref<8x512xf32, #tpu.memory_space<vmem>>, vector<1x256xf32>
    %c0_52 = arith.constant 0 : index
    %c0_53 = arith.constant 0 : index
    %112 = vector.load %arg2[%c0_52, %c0_53] : memref<32x1024xf32, #tpu.memory_space<vmem>>, vector<32x256xf32>
    %113 = vector.broadcast %109 : vector<1x256xf32> to vector<32x256xf32>
    %114 = arith.mulf %113, %112 : vector<32x256xf32>
    %c0_54 = arith.constant 0 : index
    %c256_55 = arith.constant 256 : index
    %115 = vector.load %arg2[%c0_54, %c256_55] : memref<32x1024xf32, #tpu.memory_space<vmem>>, vector<32x256xf32>
    %116 = arith.subf %114, %115 : vector<32x256xf32>
    %117 = math.absf %116 : vector<32x256xf32>
    %cst_56 = arith.constant 1.000000e+00 : f32
    %118 = vector.broadcast %cst_56 : f32 to vector<32x256xf32>
    %119 = arith.subf %118, %117 : vector<32x256xf32>
    %cst_57 = arith.constant 0.000000e+00 : f32
    %120 = vector.broadcast %cst_57 : f32 to vector<32x256xf32>
    %121 = arith.maximumf %120, %119 : vector<32x256xf32>
    %c0_58 = arith.constant 0 : index
    %c512_59 = arith.constant 512 : index
    %122 = vector.load %arg2[%c0_58, %c512_59] : memref<32x1024xf32, #tpu.memory_space<vmem>>, vector<32x256xf32>
    %123 = vector.broadcast %111 : vector<1x256xf32> to vector<32x256xf32>
    %124 = arith.mulf %123, %122 : vector<32x256xf32>
    %c0_60 = arith.constant 0 : index
    %c768_61 = arith.constant 768 : index
    %125 = vector.load %arg2[%c0_60, %c768_61] : memref<32x1024xf32, #tpu.memory_space<vmem>>, vector<32x256xf32>
    %126 = arith.subf %124, %125 : vector<32x256xf32>
    %127 = math.absf %126 : vector<32x256xf32>
    %cst_62 = arith.constant 1.000000e+00 : f32
    %128 = vector.broadcast %cst_62 : f32 to vector<32x256xf32>
    %129 = arith.subf %128, %127 : vector<32x256xf32>
    %cst_63 = arith.constant 0.000000e+00 : f32
    %130 = vector.broadcast %cst_63 : f32 to vector<32x256xf32>
    %131 = arith.maximumf %130, %129 : vector<32x256xf32>
    %cst_64 = arith.constant dense<0.000000e+00> : vector<32x256xf32>
    %132 = tpu.matmul %0, %121, %cst_64 {dimension_numbers = #tpu.dot_dimension_numbers<[1], [0], [0], [1], [0, 0, 1, 1], [], []>} : vector<32x32xf32>, vector<32x256xf32>, vector<32x256xf32> -> vector<32x256xf32>
    %133 = arith.mulf %131, %132 : vector<32x256xf32>
    %cst_65 = arith.constant dense<0.000000e+00> : vector<256xf32>
    %134 = vector.multi_reduction <add>, %133, %cst_65 [0] : vector<32x256xf32> to vector<256xf32>
    %135 = vector.shape_cast %134 : vector<256xf32> to vector<1x256xf32>
    %c3_i32_66 = arith.constant 3 : i32
    %136 = vector.broadcast %c3_i32_66 : i32 to vector<8x256xi32>
    %137 = arith.cmpi eq, %1, %136 : vector<8x256xi32>
    %138 = vector.shape_cast %135 : vector<1x256xf32> to vector<1x256xf32>
    %139 = vector.broadcast %138 : vector<1x256xf32> to vector<8x256xf32>
    %140 = arith.select %137, %139, %106 : vector<8x256xi1>, vector<8x256xf32>
    %c4_i32 = arith.constant 4 : i32
    %141 = arith.addi %3, %c4_i32 : i32
    %142 = arith.index_cast %141 : i32 to index
    %c0_67 = arith.constant 0 : index
    %143 = vector.load %arg1[%142, %c0_67] : memref<8x512xf32, #tpu.memory_space<vmem>>, vector<1x256xf32>
    %144 = arith.index_cast %141 : i32 to index
    %c256_68 = arith.constant 256 : index
    %145 = vector.load %arg1[%144, %c256_68] : memref<8x512xf32, #tpu.memory_space<vmem>>, vector<1x256xf32>
    %c0_69 = arith.constant 0 : index
    %c0_70 = arith.constant 0 : index
    %146 = vector.load %arg2[%c0_69, %c0_70] : memref<32x1024xf32, #tpu.memory_space<vmem>>, vector<32x256xf32>
    %147 = vector.broadcast %143 : vector<1x256xf32> to vector<32x256xf32>
    %148 = arith.mulf %147, %146 : vector<32x256xf32>
    %c0_71 = arith.constant 0 : index
    %c256_72 = arith.constant 256 : index
    %149 = vector.load %arg2[%c0_71, %c256_72] : memref<32x1024xf32, #tpu.memory_space<vmem>>, vector<32x256xf32>
    %150 = arith.subf %148, %149 : vector<32x256xf32>
    %151 = math.absf %150 : vector<32x256xf32>
    %cst_73 = arith.constant 1.000000e+00 : f32
    %152 = vector.broadcast %cst_73 : f32 to vector<32x256xf32>
    %153 = arith.subf %152, %151 : vector<32x256xf32>
    %cst_74 = arith.constant 0.000000e+00 : f32
    %154 = vector.broadcast %cst_74 : f32 to vector<32x256xf32>
    %155 = arith.maximumf %154, %153 : vector<32x256xf32>
    %c0_75 = arith.constant 0 : index
    %c512_76 = arith.constant 512 : index
    %156 = vector.load %arg2[%c0_75, %c512_76] : memref<32x1024xf32, #tpu.memory_space<vmem>>, vector<32x256xf32>
    %157 = vector.broadcast %145 : vector<1x256xf32> to vector<32x256xf32>
    %158 = arith.mulf %157, %156 : vector<32x256xf32>
    %c0_77 = arith.constant 0 : index
    %c768_78 = arith.constant 768 : index
    %159 = vector.load %arg2[%c0_77, %c768_78] : memref<32x1024xf32, #tpu.memory_space<vmem>>, vector<32x256xf32>
    %160 = arith.subf %158, %159 : vector<32x256xf32>
    %161 = math.absf %160 : vector<32x256xf32>
    %cst_79 = arith.constant 1.000000e+00 : f32
    %162 = vector.broadcast %cst_79 : f32 to vector<32x256xf32>
    %163 = arith.subf %162, %161 : vector<32x256xf32>
    %cst_80 = arith.constant 0.000000e+00 : f32
    %164 = vector.broadcast %cst_80 : f32 to vector<32x256xf32>
    %165 = arith.maximumf %164, %163 : vector<32x256xf32>
    %cst_81 = arith.constant dense<0.000000e+00> : vector<32x256xf32>
    %166 = tpu.matmul %0, %155, %cst_81 {dimension_numbers = #tpu.dot_dimension_numbers<[1], [0], [0], [1], [0, 0, 1, 1], [], []>} : vector<32x32xf32>, vector<32x256xf32>, vector<32x256xf32> -> vector<32x256xf32>
    %167 = arith.mulf %165, %166 : vector<32x256xf32>
    %cst_82 = arith.constant dense<0.000000e+00> : vector<256xf32>
    %168 = vector.multi_reduction <add>, %167, %cst_82 [0] : vector<32x256xf32> to vector<256xf32>
    %169 = vector.shape_cast %168 : vector<256xf32> to vector<1x256xf32>
    %c4_i32_83 = arith.constant 4 : i32
    %170 = vector.broadcast %c4_i32_83 : i32 to vector<8x256xi32>
    %171 = arith.cmpi eq, %1, %170 : vector<8x256xi32>
    %172 = vector.shape_cast %169 : vector<1x256xf32> to vector<1x256xf32>
    %173 = vector.broadcast %172 : vector<1x256xf32> to vector<8x256xf32>
    %174 = arith.select %171, %173, %140 : vector<8x256xi1>, vector<8x256xf32>
    %c5_i32 = arith.constant 5 : i32
    %175 = arith.addi %3, %c5_i32 : i32
    %176 = arith.index_cast %175 : i32 to index
    %c0_84 = arith.constant 0 : index
    %177 = vector.load %arg1[%176, %c0_84] : memref<8x512xf32, #tpu.memory_space<vmem>>, vector<1x256xf32>
    %178 = arith.index_cast %175 : i32 to index
    %c256_85 = arith.constant 256 : index
    %179 = vector.load %arg1[%178, %c256_85] : memref<8x512xf32, #tpu.memory_space<vmem>>, vector<1x256xf32>
    %c0_86 = arith.constant 0 : index
    %c0_87 = arith.constant 0 : index
    %180 = vector.load %arg2[%c0_86, %c0_87] : memref<32x1024xf32, #tpu.memory_space<vmem>>, vector<32x256xf32>
    %181 = vector.broadcast %177 : vector<1x256xf32> to vector<32x256xf32>
    %182 = arith.mulf %181, %180 : vector<32x256xf32>
    %c0_88 = arith.constant 0 : index
    %c256_89 = arith.constant 256 : index
    %183 = vector.load %arg2[%c0_88, %c256_89] : memref<32x1024xf32, #tpu.memory_space<vmem>>, vector<32x256xf32>
    %184 = arith.subf %182, %183 : vector<32x256xf32>
    %185 = math.absf %184 : vector<32x256xf32>
    %cst_90 = arith.constant 1.000000e+00 : f32
    %186 = vector.broadcast %cst_90 : f32 to vector<32x256xf32>
    %187 = arith.subf %186, %185 : vector<32x256xf32>
    %cst_91 = arith.constant 0.000000e+00 : f32
    %188 = vector.broadcast %cst_91 : f32 to vector<32x256xf32>
    %189 = arith.maximumf %188, %187 : vector<32x256xf32>
    %c0_92 = arith.constant 0 : index
    %c512_93 = arith.constant 512 : index
    %190 = vector.load %arg2[%c0_92, %c512_93] : memref<32x1024xf32, #tpu.memory_space<vmem>>, vector<32x256xf32>
    %191 = vector.broadcast %179 : vector<1x256xf32> to vector<32x256xf32>
    %192 = arith.mulf %191, %190 : vector<32x256xf32>
    %c0_94 = arith.constant 0 : index
    %c768_95 = arith.constant 768 : index
    %193 = vector.load %arg2[%c0_94, %c768_95] : memref<32x1024xf32, #tpu.memory_space<vmem>>, vector<32x256xf32>
    %194 = arith.subf %192, %193 : vector<32x256xf32>
    %195 = math.absf %194 : vector<32x256xf32>
    %cst_96 = arith.constant 1.000000e+00 : f32
    %196 = vector.broadcast %cst_96 : f32 to vector<32x256xf32>
    %197 = arith.subf %196, %195 : vector<32x256xf32>
    %cst_97 = arith.constant 0.000000e+00 : f32
    %198 = vector.broadcast %cst_97 : f32 to vector<32x256xf32>
    %199 = arith.maximumf %198, %197 : vector<32x256xf32>
    %cst_98 = arith.constant dense<0.000000e+00> : vector<32x256xf32>
    %200 = tpu.matmul %0, %189, %cst_98 {dimension_numbers = #tpu.dot_dimension_numbers<[1], [0], [0], [1], [0, 0, 1, 1], [], []>} : vector<32x32xf32>, vector<32x256xf32>, vector<32x256xf32> -> vector<32x256xf32>
    %201 = arith.mulf %199, %200 : vector<32x256xf32>
    %cst_99 = arith.constant dense<0.000000e+00> : vector<256xf32>
    %202 = vector.multi_reduction <add>, %201, %cst_99 [0] : vector<32x256xf32> to vector<256xf32>
    %203 = vector.shape_cast %202 : vector<256xf32> to vector<1x256xf32>
    %c5_i32_100 = arith.constant 5 : i32
    %204 = vector.broadcast %c5_i32_100 : i32 to vector<8x256xi32>
    %205 = arith.cmpi eq, %1, %204 : vector<8x256xi32>
    %206 = vector.shape_cast %203 : vector<1x256xf32> to vector<1x256xf32>
    %207 = vector.broadcast %206 : vector<1x256xf32> to vector<8x256xf32>
    %208 = arith.select %205, %207, %174 : vector<8x256xi1>, vector<8x256xf32>
    %c6_i32 = arith.constant 6 : i32
    %209 = arith.addi %3, %c6_i32 : i32
    %210 = arith.index_cast %209 : i32 to index
    %c0_101 = arith.constant 0 : index
    %211 = vector.load %arg1[%210, %c0_101] : memref<8x512xf32, #tpu.memory_space<vmem>>, vector<1x256xf32>
    %212 = arith.index_cast %209 : i32 to index
    %c256_102 = arith.constant 256 : index
    %213 = vector.load %arg1[%212, %c256_102] : memref<8x512xf32, #tpu.memory_space<vmem>>, vector<1x256xf32>
    %c0_103 = arith.constant 0 : index
    %c0_104 = arith.constant 0 : index
    %214 = vector.load %arg2[%c0_103, %c0_104] : memref<32x1024xf32, #tpu.memory_space<vmem>>, vector<32x256xf32>
    %215 = vector.broadcast %211 : vector<1x256xf32> to vector<32x256xf32>
    %216 = arith.mulf %215, %214 : vector<32x256xf32>
    %c0_105 = arith.constant 0 : index
    %c256_106 = arith.constant 256 : index
    %217 = vector.load %arg2[%c0_105, %c256_106] : memref<32x1024xf32, #tpu.memory_space<vmem>>, vector<32x256xf32>
    %218 = arith.subf %216, %217 : vector<32x256xf32>
    %219 = math.absf %218 : vector<32x256xf32>
    %cst_107 = arith.constant 1.000000e+00 : f32
    %220 = vector.broadcast %cst_107 : f32 to vector<32x256xf32>
    %221 = arith.subf %220, %219 : vector<32x256xf32>
    %cst_108 = arith.constant 0.000000e+00 : f32
    %222 = vector.broadcast %cst_108 : f32 to vector<32x256xf32>
    %223 = arith.maximumf %222, %221 : vector<32x256xf32>
    %c0_109 = arith.constant 0 : index
    %c512_110 = arith.constant 512 : index
    %224 = vector.load %arg2[%c0_109, %c512_110] : memref<32x1024xf32, #tpu.memory_space<vmem>>, vector<32x256xf32>
    %225 = vector.broadcast %213 : vector<1x256xf32> to vector<32x256xf32>
    %226 = arith.mulf %225, %224 : vector<32x256xf32>
    %c0_111 = arith.constant 0 : index
    %c768_112 = arith.constant 768 : index
    %227 = vector.load %arg2[%c0_111, %c768_112] : memref<32x1024xf32, #tpu.memory_space<vmem>>, vector<32x256xf32>
    %228 = arith.subf %226, %227 : vector<32x256xf32>
    %229 = math.absf %228 : vector<32x256xf32>
    %cst_113 = arith.constant 1.000000e+00 : f32
    %230 = vector.broadcast %cst_113 : f32 to vector<32x256xf32>
    %231 = arith.subf %230, %229 : vector<32x256xf32>
    %cst_114 = arith.constant 0.000000e+00 : f32
    %232 = vector.broadcast %cst_114 : f32 to vector<32x256xf32>
    %233 = arith.maximumf %232, %231 : vector<32x256xf32>
    %cst_115 = arith.constant dense<0.000000e+00> : vector<32x256xf32>
    %234 = tpu.matmul %0, %223, %cst_115 {dimension_numbers = #tpu.dot_dimension_numbers<[1], [0], [0], [1], [0, 0, 1, 1], [], []>} : vector<32x32xf32>, vector<32x256xf32>, vector<32x256xf32> -> vector<32x256xf32>
    %235 = arith.mulf %233, %234 : vector<32x256xf32>
    %cst_116 = arith.constant dense<0.000000e+00> : vector<256xf32>
    %236 = vector.multi_reduction <add>, %235, %cst_116 [0] : vector<32x256xf32> to vector<256xf32>
    %237 = vector.shape_cast %236 : vector<256xf32> to vector<1x256xf32>
    %c6_i32_117 = arith.constant 6 : i32
    %238 = vector.broadcast %c6_i32_117 : i32 to vector<8x256xi32>
    %239 = arith.cmpi eq, %1, %238 : vector<8x256xi32>
    %240 = vector.shape_cast %237 : vector<1x256xf32> to vector<1x256xf32>
    %241 = vector.broadcast %240 : vector<1x256xf32> to vector<8x256xf32>
    %242 = arith.select %239, %241, %208 : vector<8x256xi1>, vector<8x256xf32>
    %c7_i32 = arith.constant 7 : i32
    %243 = arith.addi %3, %c7_i32 : i32
    %244 = arith.index_cast %243 : i32 to index
    %c0_118 = arith.constant 0 : index
    %245 = vector.load %arg1[%244, %c0_118] : memref<8x512xf32, #tpu.memory_space<vmem>>, vector<1x256xf32>
    %246 = arith.index_cast %243 : i32 to index
    %c256_119 = arith.constant 256 : index
    %247 = vector.load %arg1[%246, %c256_119] : memref<8x512xf32, #tpu.memory_space<vmem>>, vector<1x256xf32>
    %c0_120 = arith.constant 0 : index
    %c0_121 = arith.constant 0 : index
    %248 = vector.load %arg2[%c0_120, %c0_121] : memref<32x1024xf32, #tpu.memory_space<vmem>>, vector<32x256xf32>
    %249 = vector.broadcast %245 : vector<1x256xf32> to vector<32x256xf32>
    %250 = arith.mulf %249, %248 : vector<32x256xf32>
    %c0_122 = arith.constant 0 : index
    %c256_123 = arith.constant 256 : index
    %251 = vector.load %arg2[%c0_122, %c256_123] : memref<32x1024xf32, #tpu.memory_space<vmem>>, vector<32x256xf32>
    %252 = arith.subf %250, %251 : vector<32x256xf32>
    %253 = math.absf %252 : vector<32x256xf32>
    %cst_124 = arith.constant 1.000000e+00 : f32
    %254 = vector.broadcast %cst_124 : f32 to vector<32x256xf32>
    %255 = arith.subf %254, %253 : vector<32x256xf32>
    %cst_125 = arith.constant 0.000000e+00 : f32
    %256 = vector.broadcast %cst_125 : f32 to vector<32x256xf32>
    %257 = arith.maximumf %256, %255 : vector<32x256xf32>
    %c0_126 = arith.constant 0 : index
    %c512_127 = arith.constant 512 : index
    %258 = vector.load %arg2[%c0_126, %c512_127] : memref<32x1024xf32, #tpu.memory_space<vmem>>, vector<32x256xf32>
    %259 = vector.broadcast %247 : vector<1x256xf32> to vector<32x256xf32>
    %260 = arith.mulf %259, %258 : vector<32x256xf32>
    %c0_128 = arith.constant 0 : index
    %c768_129 = arith.constant 768 : index
    %261 = vector.load %arg2[%c0_128, %c768_129] : memref<32x1024xf32, #tpu.memory_space<vmem>>, vector<32x256xf32>
    %262 = arith.subf %260, %261 : vector<32x256xf32>
    %263 = math.absf %262 : vector<32x256xf32>
    %cst_130 = arith.constant 1.000000e+00 : f32
    %264 = vector.broadcast %cst_130 : f32 to vector<32x256xf32>
    %265 = arith.subf %264, %263 : vector<32x256xf32>
    %cst_131 = arith.constant 0.000000e+00 : f32
    %266 = vector.broadcast %cst_131 : f32 to vector<32x256xf32>
    %267 = arith.maximumf %266, %265 : vector<32x256xf32>
    %cst_132 = arith.constant dense<0.000000e+00> : vector<32x256xf32>
    %268 = tpu.matmul %0, %257, %cst_132 {dimension_numbers = #tpu.dot_dimension_numbers<[1], [0], [0], [1], [0, 0, 1, 1], [], []>} : vector<32x32xf32>, vector<32x256xf32>, vector<32x256xf32> -> vector<32x256xf32>
    %269 = arith.mulf %267, %268 : vector<32x256xf32>
    %cst_133 = arith.constant dense<0.000000e+00> : vector<256xf32>
    %270 = vector.multi_reduction <add>, %269, %cst_133 [0] : vector<32x256xf32> to vector<256xf32>
    %271 = vector.shape_cast %270 : vector<256xf32> to vector<1x256xf32>
    %c7_i32_134 = arith.constant 7 : i32
    %272 = vector.broadcast %c7_i32_134 : i32 to vector<8x256xi32>
    %273 = arith.cmpi eq, %1, %272 : vector<8x256xi32>
    %274 = vector.shape_cast %271 : vector<1x256xf32> to vector<1x256xf32>
    %275 = vector.broadcast %274 : vector<1x256xf32> to vector<8x256xf32>
    %276 = arith.select %273, %275, %242 : vector<8x256xi1>, vector<8x256xf32>
    %277 = arith.index_cast %3 : i32 to index
    %c0_135 = arith.constant 0 : index
    %278 = vector.load %arg4[%277, %c0_135] : memref<8x256xf32, #tpu.memory_space<vmem>>, vector<8x256xf32>
    tpu.vector_store %arg4[%277, %c0_135], %276 {strides = array<i32>} : memref<8x256xf32, #tpu.memory_space<vmem>>, vector<8x256xf32>,
    %c1_i32_136 = arith.constant 1 : i32
    return
  }
  func.func @transform_0(%arg0: i32) -> (i32, i32) {
    %c0_i32 = arith.constant 0 : i32
    %c0_i32_0 = arith.constant 0 : i32
    return %arg0, %c0_i32 : i32, i32
  }
  func.func @transform_1(%arg0: i32) -> (i32, i32) {
    %c0_i32 = arith.constant 0 : i32
    %c0_i32_0 = arith.constant 0 : i32
    %c0_i32_1 = arith.constant 0 : i32
    return %c0_i32, %c0_i32_0 : i32, i32
  }
  func.func @transform_2(%arg0: i32) -> (i32, i32) {
    %c0_i32 = arith.constant 0 : i32
    %c0_i32_0 = arith.constant 0 : i32
    %c0_i32_1 = arith.constant 0 : i32
    return %c0_i32, %c0_i32_0 : i32, i32
  }
  func.func @transform_3(%arg0: i32) -> (i32, i32) {
    %c0_i32 = arith.constant 0 : i32
    %c0_i32_0 = arith.constant 0 : i32
    return %arg0, %c0_i32 : i32, i32
  }
}

</mosaic_0001>

<llo_original>
// kernel: tpu_custom_call.1
$region0: #{tpu_custom_call.1}
  #allocation0 [shape = 'u32[]', space=smem, size = 0x4, offset = 0x4, fixed_abs, tag = 'smem constant byte address 0x4 - core index']
  #allocation1 [shape = 'u32[144,128]{1,0:T(1,128)}', space=vmem, size = 0x12000, scoped, tag = 'internal scratch']
  %s0 = inlined_call_operand.hbm [shape: f32[8,512], index: 0, kind: input, shape index: {}]
  %s1 = inlined_call_operand.hbm [shape: f32[32,1024], index: 1, kind: input, shape index: {}]
  %s2 = inlined_call_operand.hbm [shape: f32[32,32], index: 2, kind: input, shape index: {}]
  %s3 = inlined_call_operand.hbm [shape: f32[8,256], index: 3, kind: output, shape index: {}]
  %s4 = sld [smem:[#allocation0]]
  $region34: #{tpu_custom_call.1} parent=0
    _
  %s6 = ssub.s32 1, %s4
  %s7 = scalar_select 0, %s6, %s4
  $region1: #{tpu_custom_call.1} parent=0
    #allocation2 [shape = 'u8[16384]{0}', space=vmem, size = 0x4000, scoped, tag = 'input window, operand 0, single buffered']
    #allocation3 [shape = 's32[1]{0}', space=sflag, size = 0x4, scoped, tag = 'scoped memory for tpu_custom_call.1']
    #allocation4 [shape = 's32[1]{0}', space=sflag, size = 0x4, scoped, tag = 'scoped memory for tpu_custom_call.1']
    #allocation5 [shape = 'u8[131072]{0}', space=vmem, size = 0x20000, scoped, tag = 'input window, operand 1, single buffered']
    #allocation6 [shape = 's32[1]{0}', space=sflag, size = 0x4, scoped, tag = 'scoped memory for tpu_custom_call.1']
    #allocation7 [shape = 'u8[16384]{0}', space=vmem, size = 0x4000, scoped, tag = 'input window, operand 2, single buffered']
    #allocation8 [shape = 'u8[8192]{0}', space=vmem, size = 0x2000, scoped, tag = 'output window, operand 0, single buffered']
    %8 = vsyncpa [#allocation3], 0
    %9 = vsyncpa [#allocation6], 0
    %10 = vsyncpa [#allocation4], 0
    // Predicated region
    $region2: #{tpu_custom_call.1} parent=1 // pred_check
      _
    $region3: #{tpu_custom_call.1} parent=1 // pred_check_branch
      %12 = sbr.rel (0) target = $region5
    $region4: #{tpu_custom_call.1} parent=1 // pred_region
      %s14 = ssub.s32 512, 512
      %15 = vsyncadd [#allocation3], %s14
      %s17 = sshll.u32 [#allocation2], 4
      %s18 = int_to_ptr.vmem [resolvable:$true] %s17
      %20 = dma.hbm_to_vmem [thread:$0]  %s0, 512, %s18, [#allocation3]
    $region5: #{tpu_custom_call.1} parent=1 // pred_fallthru
      _
    // Predicated region
    $region6: #{tpu_custom_call.1} parent=1 // pred_check
      _
    $region7: #{tpu_custom_call.1} parent=1 // pred_check_branch
      %22 = sbr.rel (0) target = $region9
    $region8: #{tpu_custom_call.1} parent=1 // pred_region
      %s24 = ssub.s32 4096, 4096
      %25 = vsyncadd [#allocation6], %s24
      %s26 = sshll.u32 [#allocation5], 4
      %s27 = int_to_ptr.vmem [resolvable:$true] %s26
      %32 = dma.hbm_to_vmem [thread:$0]  %s1, 4096, %s27, [#allocation6], 1024, 1024, 64
    $region9: #{tpu_custom_call.1} parent=1 // pred_fallthru
      _
    // Predicated region
    $region10: #{tpu_custom_call.1} parent=1 // pred_check
      _
    $region11: #{tpu_custom_call.1} parent=1 // pred_check_branch
      %34 = sbr.rel (0) target = $region13
    $region12: #{tpu_custom_call.1} parent=1 // pred_region
      %s36 = ssub.s32 512, 512
      %37 = vsyncadd [#allocation6], %s36
      %s38 = sshll.u32 [#allocation7], 4
      %s39 = int_to_ptr.vmem [resolvable:$true] %s38
      %44 = dma.hbm_to_vmem [thread:$0]  %s2, 512, %s39, [#allocation6], 128, 128, 8
    $region13: #{tpu_custom_call.1} parent=1 // pred_fallthru
      _
    // Predicated region
    $region14: #{tpu_custom_call.1} parent=1 // pred_check
      _
    $region15: #{tpu_custom_call.1} parent=1 // pred_check_branch
      %46 = sbr.rel (0) target = $region17
    $region16: #{tpu_custom_call.1} parent=1 // pred_region
      %47 = dma.done [#allocation3], 512
    $region17: #{tpu_custom_call.1} parent=1 // pred_fallthru
      _
    // Predicated region
    $region18: #{tpu_custom_call.1} parent=1 // pred_check
      _
    $region19: #{tpu_custom_call.1} parent=1 // pred_check_branch
      %49 = sbr.rel (0) target = $region21
    $region20: #{tpu_custom_call.1} parent=1 // pred_region
      %50 = dma.done [#allocation6], 4096
    $region21: #{tpu_custom_call.1} parent=1 // pred_fallthru
      _
    // Predicated region
    $region22: #{tpu_custom_call.1} parent=1 // pred_check
      _
    $region23: #{tpu_custom_call.1} parent=1 // pred_check_branch
      %52 = sbr.rel (0) target = $region25
    $region24: #{tpu_custom_call.1} parent=1 // pred_region
      %53 = dma.done [#allocation6], 512
    $region25: #{tpu_custom_call.1} parent=1 // pred_fallthru
      _
    %v54 = vld [vmem:[#allocation7] sm:$0xff]
    %v55 = vld [vmem:[#allocation7 + $0x8] sm:$0xff]
    %v56 = vld [vmem:[#allocation7 + $0x10] sm:$0xff]
    %v57 = vld [vmem:[#allocation7 + $0x18] sm:$0xff]
    %v58 = vlaneseq
    %v59 = vshrl.u32 %v58, 7
    %s60 = smul.u32 0, 4
    %s61 = smul.addr %s60, 8
    %s62 = scalar_lea.vmem [#allocation2], %s61
    %v63 = vld [vmem:[%s62] ss:$8 sm:$0x3]
    %s64 = scalar_lea.vmem %s62, 16 [#allocation2]
    %v65 = vld [vmem:[%s64] ss:$8 sm:$0x3]
    %v66 = vld [vmem:[#allocation5] sm:$0xff]
    %v67 = vld [vmem:[#allocation5 + $0x8] sm:$0xff]
    %v68 = vld [vmem:[#allocation5 + $0x40] sm:$0xff]
    %v69 = vld [vmem:[#allocation5 + $0x48] sm:$0xff]
    %v70 = vld [vmem:[#allocation5 + $0x80] sm:$0xff]
    %v71 = vld [vmem:[#allocation5 + $0x88] sm:$0xff]
    %v72 = vld [vmem:[#allocation5 + $0xc0] sm:$0xff]
    %v73 = vld [vmem:[#allocation5 + $0xc8] sm:$0xff]
    %v75 = vlaneseq
    %v76 = vshrl.u32 %v75, 7
    %v77 = vsub.s32 0, %v76
    %v78 = vrot.slane %v63, %v77
    %v79 = vlaneseq
    %v80 = vshrl.u32 %v79, 7
    %v81 = vsub.s32 1, %v80
    %v82 = vrot.slane %v63, %v81
    %v85 = vmul.f32 %v78, %v66
    %v86 = vmul.f32 %v82, %v67
    %v87 = vmul.f32 %v78, %v68
    %v88 = vmul.f32 %v82, %v69
    %v89 = vmul.f32 %v78, %v70
    %v90 = vmul.f32 %v82, %v71
    %v91 = vmul.f32 %v78, %v72
    %v92 = vmul.f32 %v82, %v73
    %v93 = vld [vmem:[#allocation5 + $0x10] sm:$0xff]
    %v94 = vld [vmem:[#allocation5 + $0x18] sm:$0xff]
    %v95 = vld [vmem:[#allocation5 + $0x50] sm:$0xff]
    %v96 = vld [vmem:[#allocation5 + $0x58] sm:$0xff]
    %v97 = vld [vmem:[#allocation5 + $0x90] sm:$0xff]
    %v98 = vld [vmem:[#allocation5 + $0x98] sm:$0xff]
    %v99 = vld [vmem:[#allocation5 + $0xd0] sm:$0xff]
    %v100 = vld [vmem:[#allocation5 + $0xd8] sm:$0xff]
    %v101 = vsub.f32 %v85, %v93
    %v102 = vsub.f32 %v86, %v94
    %v103 = vsub.f32 %v87, %v95
    %v104 = vsub.f32 %v88, %v96
    %v105 = vsub.f32 %v89, %v97
    %v106 = vsub.f32 %v90, %v98
    %v107 = vsub.f32 %v91, %v99
    %v108 = vsub.f32 %v92, %v100
    %v109 = vand.u32 2147483647, %v101
    %v110 = vand.u32 2147483647, %v102
    %v111 = vand.u32 2147483647, %v103
    %v112 = vand.u32 2147483647, %v104
    %v113 = vand.u32 2147483647, %v105
    %v114 = vand.u32 2147483647, %v106
    %v115 = vand.u32 2147483647, %v107
    %v116 = vand.u32 2147483647, %v108
    %v117 = vsub.f32 1.0, %v109
    %v118 = vsub.f32 1.0, %v110
    %v119 = vsub.f32 1.0, %v111
    %v120 = vsub.f32 1.0, %v112
    %v121 = vsub.f32 1.0, %v113
    %v122 = vsub.f32 1.0, %v114
    %v123 = vsub.f32 1.0, %v115
    %v124 = vsub.f32 1.0, %v116
    %v125 = vmax.f32 %v117, 0.0
    %v126 = vmax.f32 %v118, 0.0
    %v127 = vmax.f32 %v119, 0.0
    %v128 = vmax.f32 %v120, 0.0
    %v129 = vmax.f32 %v121, 0.0
    %v130 = vmax.f32 %v122, 0.0
    %v131 = vmax.f32 %v123, 0.0
    %v132 = vmax.f32 %v124, 0.0
    %v133 = vld [vmem:[#allocation5 + $0x20] sm:$0xff]
    %v134 = vld [vmem:[#allocation5 + $0x28] sm:$0xff]
    %v135 = vld [vmem:[#allocation5 + $0x60] sm:$0xff]
    %v136 = vld [vmem:[#allocation5 + $0x68] sm:$0xff]
    %v137 = vld [vmem:[#allocation5 + $0xa0] sm:$0xff]
    %v138 = vld [vmem:[#allocation5 + $0xa8] sm:$0xff]
    %v139 = vld [vmem:[#allocation5 + $0xe0] sm:$0xff]
    %v140 = vld [vmem:[#allocation5 + $0xe8] sm:$0xff]
    %v142 = vlaneseq
    %v143 = vshrl.u32 %v142, 7
    %v144 = vsub.s32 0, %v143
    %v145 = vrot.slane %v65, %v144
    %v146 = vlaneseq
    %v147 = vshrl.u32 %v146, 7
    %v148 = vsub.s32 1, %v147
    %v149 = vrot.slane %v65, %v148
    %v152 = vmul.f32 %v145, %v133
    %v153 = vmul.f32 %v149, %v134
    %v154 = vmul.f32 %v145, %v135
    %v155 = vmul.f32 %v149, %v136
    %v156 = vmul.f32 %v145, %v137
    %v157 = vmul.f32 %v149, %v138
    %v158 = vmul.f32 %v145, %v139
    %v159 = vmul.f32 %v149, %v140
    %v160 = vld [vmem:[#allocation5 + $0x30] sm:$0xff]
    %v161 = vld [vmem:[#allocation5 + $0x38] sm:$0xff]
    %v162 = vld [vmem:[#allocation5 + $0x70] sm:$0xff]
    %v163 = vld [vmem:[#allocation5 + $0x78] sm:$0xff]
    %v164 = vld [vmem:[#allocation5 + $0xb0] sm:$0xff]
    %v165 = vld [vmem:[#allocation5 + $0xb8] sm:$0xff]
    %v166 = vld [vmem:[#allocation5 + $0xf0] sm:$0xff]
    %v167 = vld [vmem:[#allocation5 + $0xf8] sm:$0xff]
    %v168 = vsub.f32 %v152, %v160
    %v169 = vsub.f32 %v153, %v161
    %v170 = vsub.f32 %v154, %v162
    %v171 = vsub.f32 %v155, %v163
    %v172 = vsub.f32 %v156, %v164
    %v173 = vsub.f32 %v157, %v165
    %v174 = vsub.f32 %v158, %v166
    %v175 = vsub.f32 %v159, %v167
    %v176 = vand.u32 2147483647, %v168
    %v177 = vand.u32 2147483647, %v169
    %v178 = vand.u32 2147483647, %v170
    %v179 = vand.u32 2147483647, %v171
    %v180 = vand.u32 2147483647, %v172
    %v181 = vand.u32 2147483647, %v173
    %v182 = vand.u32 2147483647, %v174
    %v183 = vand.u32 2147483647, %v175
    %v184 = vsub.f32 1.0, %v176
    %v185 = vsub.f32 1.0, %v177
    %v186 = vsub.f32 1.0, %v178
    %v187 = vsub.f32 1.0, %v179
    %v188 = vsub.f32 1.0, %v180
    %v189 = vsub.f32 1.0, %v181
    %v190 = vsub.f32 1.0, %v182
    %v191 = vsub.f32 1.0, %v183
    %v192 = vmax.f32 %v184, 0.0
    %v193 = vmax.f32 %v185, 0.0
    %v194 = vmax.f32 %v186, 0.0
    %v195 = vmax.f32 %v187, 0.0
    %v196 = vmax.f32 %v188, 0.0
    %v197 = vmax.f32 %v189, 0.0
    %v198 = vmax.f32 %v190, 0.0
    %v199 = vmax.f32 %v191, 0.0
    %vm200 = vcmask 261120
    %v202 = vsel %vm200, %v54, 0
    %v205 = vsel %vm200, %v55, 0
    %v208 = vsel %vm200, %v56, 0
    %v211 = vsel %vm200, %v57, 0
    %213 = vmatprep.subr.mxu0 0.0
    %214 = vmatpush1.msra.mxu0 0.0
    %215 = vmatprep.subr.mxu0 0.0
    %216 = vmatpush1.msra.mxu0 0.0
    %217 = vmatprep.subr.mxu0 0.0
    %218 = vmatpush1.msra.mxu0 0.0
    %219 = vmatprep.subr.mxu0 0.0
    %220 = vmatpush1.msra.mxu0 0.0
    %221 = vmatprep.subr.mxu0 0.0
    %222 = vmatpush1.msra.mxu0 0.0
    %223 = vmatprep.subr.mxu0 0.0
    %224 = vmatpush1.msra.mxu0 0.0
    %225 = vmatprep.subr.mxu0 0.0
    %226 = vmatpush1.msra.mxu0 0.0
    %227 = vmatprep.subr.mxu0 0.0
    %228 = vmatpush1.msra.mxu0 0.0
    %229 = vmatprep.subr.mxu0 0.0
    %230 = vmatpush1.msra.mxu0 0.0
    %231 = vmatprep.subr.mxu0 0.0
    %232 = vmatpush1.msra.mxu0 0.0
    %233 = vmatprep.subr.mxu0 0.0
    %234 = vmatpush1.msra.mxu0 0.0
    %235 = vmatprep.subr.mxu0 0.0
    %236 = vmatpush1.msra.mxu0 0.0
    %237 = vmatprep.subr.mxu0 %v132
    %238 = vmatpush1.msra.mxu0 %v131
    %239 = vmatprep.subr.mxu0 %v130
    %240 = vmatpush1.msra.mxu0 %v129
    %241 = vmatprep.subr.mxu0 %v128
    %242 = vmatpush1.msra.mxu0 %v127
    %243 = vmatprep.subr.mxu0 %v126
    %244 = vmatpush1.msra.mxu0 %v125
    %245 = vmatprep.subr.mxu0 0.0
    %246 = vmatpush2.msra.mxu0 0.0
    %247 = vmatprep.subr.mxu0 0.0
    %248 = vmatpush2.msra.mxu0 0.0
    %249 = vmatprep.subr.mxu0 0.0
    %250 = vmatpush2.msra.mxu0 0.0
    %251 = vmatprep.subr.mxu0 0.0
    %252 = vmatpush2.msra.mxu0 0.0
    %253 = vmatprep.subr.mxu0 0.0
    %254 = vmatpush2.msra.mxu0 0.0
    %255 = vmatprep.subr.mxu0 0.0
    %256 = vmatpush2.msra.mxu0 0.0
    %257 = vmatprep.subr.mxu0 0.0
    %258 = vmatpush2.msra.mxu0 0.0
    %259 = vmatprep.subr.mxu0 0.0
    %260 = vmatpush2.msra.mxu0 0.0
    %261 = vmatprep.subr.mxu0 0.0
    %262 = vmatpush2.msra.mxu0 0.0
    %263 = vmatprep.subr.mxu0 0.0
    %264 = vmatpush2.msra.mxu0 0.0
    %265 = vmatprep.subr.mxu0 0.0
    %266 = vmatpush2.msra.mxu0 0.0
    %267 = vmatprep.subr.mxu0 0.0
    %268 = vmatpush2.msra.mxu0 0.0
    %269 = vmatprep.subr.mxu0 0.0
    %270 = vmatpush2.msra.mxu0 0.0
    %271 = vmatprep.subr.mxu0 0.0
    %272 = vmatpush2.msra.mxu0 0.0
    %273 = vmatprep.subr.mxu0 0.0
    %274 = vmatpush2.msra.mxu0 0.0
    %275 = vmatprep.subr.mxu0 0.0
    %276 = vmatpush2.msra.mxu0 0.0
    %277 = vmatprep.mubr.f32.mxu0 0.0
    %278 = vmatmul.mubr.f32.gmra.mxu0 %v202
    %v279 = vpop.f32.mrf.mxu0
    %v280 = vadd.f32 0.0, %v279
    %v281 = vpop.f32.mrf.mxu0
    %v282 = vadd.f32 0.0, %v281
    %283 = vmatprep.mubr.f32.mxu0 0.0
    %284 = vmatmul.mubr.f32.gmra.mxu0 %v205
    %v285 = vpop.f32.mrf.mxu0
    %v286 = vadd.f32 0.0, %v285
    %v287 = vpop.f32.mrf.mxu0
    %v288 = vadd.f32 0.0, %v287
    %289 = vmatprep.mubr.f32.mxu0 0.0
    %290 = vmatmul.mubr.f32.gmra.mxu0 %v208
    %v291 = vpop.f32.mrf.mxu0
    %v292 = vadd.f32 0.0, %v291
    %v293 = vpop.f32.mrf.mxu0
    %v294 = vadd.f32 0.0, %v293
    %295 = vmatprep.mubr.f32.mxu0 0.0
    %296 = vmatmul.mubr.f32.gmra.mxu0 %v211
    %v297 = vpop.f32.mrf.mxu0
    %v298 = vadd.f32 0.0, %v297
    %v299 = vpop.f32.mrf.mxu0
    %v300 = vadd.f32 0.0, %v299
    %301 = vdwg.mxu0
    %v302 = vmul.f32 %v192, %v280
    %v303 = vmul.f32 %v193, %v282
    %v304 = vmul.f32 %v194, %v286
    %v305 = vmul.f32 %v195, %v288
    %v306 = vmul.f32 %v196, %v292
    %v307 = vmul.f32 %v197, %v294
    %v308 = vmul.f32 %v198, %v298
    %v309 = vmul.f32 %v199, %v300
    %v310 = vadd.f32 %v302, %v304
    %v311 = vadd.f32 %v310, %v306
    %v312 = vadd.f32 %v311, %v308
    %v313 = vrot.slane %v312, 4
    %v314 = vadd.f32 %v312, %v313
    %v315 = vrot.slane %v314, 2
    %v316 = vadd.f32 %v314, %v315
    %v317 = vrot.slane %v316, 1
    %v318 = vadd.f32 %v316, %v317
    %v319 = vadd.f32 %v303, %v305
    %v320 = vadd.f32 %v319, %v307
    %v321 = vadd.f32 %v320, %v309
    %v322 = vrot.slane %v321, 4
    %v323 = vadd.f32 %v321, %v322
    %v324 = vrot.slane %v323, 2
    %v325 = vadd.f32 %v323, %v324
    %v326 = vrot.slane %v325, 1
    %v327 = vadd.f32 %v325, %v326
    %vm328 = vcmp.eq.s32.totalorder %v59, 0
    %v329 = vsel %vm328, %v318, 0.0
    %v330 = vsel %vm328, %v327, 0.0
    %s331 = sadd.s32 0, 1
    %s332 = sshra.s32 %s331, 3
    %s333 = sand.u32 %s331, 7
    %s334 = sshra.s32 %s331, 3
    %s335 = sand.u32 %s331, 7
    %s336 = smul.u32 %s332, 4
    %s337 = smul.u32 %s336, 8
    %s338 = sadd.s32 %s337, %s335
    %s339 = scalar_lea.vmem [#allocation2], %s338
    %v340 = vld [vmem:[%s339] ss:$8 sm:$0x3]
    %s341 = sadd.s32 %s336, 2
    %s342 = smul.u32 %s341, 8
    %s343 = sadd.s32 %s342, %s335
    %s344 = scalar_lea.vmem [#allocation2], %s343
    %v345 = vld [vmem:[%s344] ss:$8 sm:$0x3]
    %v347 = vlaneseq
    %v348 = vshrl.u32 %v347, 7
    %v349 = vsub.s32 0, %v348
    %v350 = vrot.slane %v340, %v349
    %v351 = vlaneseq
    %v352 = vshrl.u32 %v351, 7
    %v353 = vsub.s32 1, %v352
    %v354 = vrot.slane %v340, %v353
    %v357 = vmul.f32 %v350, %v66
    %v358 = vmul.f32 %v354, %v67
    %v359 = vmul.f32 %v350, %v68
    %v360 = vmul.f32 %v354, %v69
    %v361 = vmul.f32 %v350, %v70
    %v362 = vmul.f32 %v354, %v71
    %v363 = vmul.f32 %v350, %v72
    %v364 = vmul.f32 %v354, %v73
    %v365 = vsub.f32 %v357, %v93
    %v366 = vsub.f32 %v358, %v94
    %v367 = vsub.f32 %v359, %v95
    %v368 = vsub.f32 %v360, %v96
    %v369 = vsub.f32 %v361, %v97
    %v370 = vsub.f32 %v362, %v98
    %v371 = vsub.f32 %v363, %v99
    %v372 = vsub.f32 %v364, %v100
    %v373 = vand.u32 2147483647, %v365
    %v374 = vand.u32 2147483647, %v366
    %v375 = vand.u32 2147483647, %v367
    %v376 = vand.u32 2147483647, %v368
    %v377 = vand.u32 2147483647, %v369
    %v378 = vand.u32 2147483647, %v370
    %v379 = vand.u32 2147483647, %v371
    %v380 = vand.u32 2147483647, %v372
    %v381 = vsub.f32 1.0, %v373
    %v382 = vsub.f32 1.0, %v374
    %v383 = vsub.f32 1.0, %v375
    %v384 = vsub.f32 1.0, %v376
    %v385 = vsub.f32 1.0, %v377
    %v386 = vsub.f32 1.0, %v378
    %v387 = vsub.f32 1.0, %v379
    %v388 = vsub.f32 1.0, %v380
    %v389 = vmax.f32 %v381, 0.0
    %v390 = vmax.f32 %v382, 0.0
    %v391 = vmax.f32 %v383, 0.0
    %v392 = vmax.f32 %v384, 0.0
    %v393 = vmax.f32 %v385, 0.0
    %v394 = vmax.f32 %v386, 0.0
    %v395 = vmax.f32 %v387, 0.0
    %v396 = vmax.f32 %v388, 0.0
    %v398 = vlaneseq
    %v399 = vshrl.u32 %v398, 7
    %v400 = vsub.s32 0, %v399
    %v401 = vrot.slane %v345, %v400
    %v402 = vlaneseq
    %v403 = vshrl.u32 %v402, 7
    %v404 = vsub.s32 1, %v403
    %v405 = vrot.slane %v345, %v404
    %v408 = vmul.f32 %v401, %v133
    %v409 = vmul.f32 %v405, %v134
    %v410 = vmul.f32 %v401, %v135
    %v411 = vmul.f32 %v405, %v136
    %v412 = vmul.f32 %v401, %v137
    %v413 = vmul.f32 %v405, %v138
    %v414 = vmul.f32 %v401, %v139
    %v415 = vmul.f32 %v405, %v140
    %v416 = vsub.f32 %v408, %v160
    %v417 = vsub.f32 %v409, %v161
    %v418 = vsub.f32 %v410, %v162
    %v419 = vsub.f32 %v411, %v163
    %v420 = vsub.f32 %v412, %v164
    %v421 = vsub.f32 %v413, %v165
    %v422 = vsub.f32 %v414, %v166
    %v423 = vsub.f32 %v415, %v167
    %v424 = vand.u32 2147483647, %v416
    %v425 = vand.u32 2147483647, %v417
    %v426 = vand.u32 2147483647, %v418
    %v427 = vand.u32 2147483647, %v419
    %v428 = vand.u32 2147483647, %v420
    %v429 = vand.u32 2147483647, %v421
    %v430 = vand.u32 2147483647, %v422
    %v431 = vand.u32 2147483647, %v423
    %v432 = vsub.f32 1.0, %v424
    %v433 = vsub.f32 1.0, %v425
    %v434 = vsub.f32 1.0, %v426
    %v435 = vsub.f32 1.0, %v427
    %v436 = vsub.f32 1.0, %v428
    %v437 = vsub.f32 1.0, %v429
    %v438 = vsub.f32 1.0, %v430
    %v439 = vsub.f32 1.0, %v431
    %v440 = vmax.f32 %v432, 0.0
    %v441 = vmax.f32 %v433, 0.0
    %v442 = vmax.f32 %v434, 0.0
    %v443 = vmax.f32 %v435, 0.0
    %v444 = vmax.f32 %v436, 0.0
    %v445 = vmax.f32 %v437, 0.0
    %v446 = vmax.f32 %v438, 0.0
    %v447 = vmax.f32 %v439, 0.0
    %448 = vmatprep.subr.mxu0 0.0
    %449 = vmatpush1.msra.mxu0 0.0
    %450 = vmatprep.subr.mxu0 0.0
    %451 = vmatpush1.msra.mxu0 0.0
    %452 = vmatprep.subr.mxu0 0.0
    %453 = vmatpush1.msra.mxu0 0.0
    %454 = vmatprep.subr.mxu0 0.0
    %455 = vmatpush1.msra.mxu0 0.0
    %456 = vmatprep.subr.mxu0 0.0
    %457 = vmatpush1.msra.mxu0 0.0
    %458 = vmatprep.subr.mxu0 0.0
    %459 = vmatpush1.msra.mxu0 0.0
    %460 = vmatprep.subr.mxu0 0.0
    %461 = vmatpush1.msra.mxu0 0.0
    %462 = vmatprep.subr.mxu0 0.0
    %463 = vmatpush1.msra.mxu0 0.0
    %464 = vmatprep.subr.mxu0 0.0
    %465 = vmatpush1.msra.mxu0 0.0
    %466 = vmatprep.subr.mxu0 0.0
    %467 = vmatpush1.msra.mxu0 0.0
    %468 = vmatprep.subr.mxu0 0.0
    %469 = vmatpush1.msra.mxu0 0.0
    %470 = vmatprep.subr.mxu0 0.0
    %471 = vmatpush1.msra.mxu0 0.0
    %472 = vmatprep.subr.mxu0 %v396
    %473 = vmatpush1.msra.mxu0 %v395
    %474 = vmatprep.subr.mxu0 %v394
    %475 = vmatpush1.msra.mxu0 %v393
    %476 = vmatprep.subr.mxu0 %v392
    %477 = vmatpush1.msra.mxu0 %v391
    %478 = vmatprep.subr.mxu0 %v390
    %479 = vmatpush1.msra.mxu0 %v389
    %480 = vmatprep.subr.mxu0 0.0
    %481 = vmatpush2.msra.mxu0 0.0
    %482 = vmatprep.subr.mxu0 0.0
    %483 = vmatpush2.msra.mxu0 0.0
    %484 = vmatprep.subr.mxu0 0.0
    %485 = vmatpush2.msra.mxu0 0.0
    %486 = vmatprep.subr.mxu0 0.0
    %487 = vmatpush2.msra.mxu0 0.0
    %488 = vmatprep.subr.mxu0 0.0
    %489 = vmatpush2.msra.mxu0 0.0
    %490 = vmatprep.subr.mxu0 0.0
    %491 = vmatpush2.msra.mxu0 0.0
    %492 = vmatprep.subr.mxu0 0.0
    %493 = vmatpush2.msra.mxu0 0.0
    %494 = vmatprep.subr.mxu0 0.0
    %495 = vmatpush2.msra.mxu0 0.0
    %496 = vmatprep.subr.mxu0 0.0
    %497 = vmatpush2.msra.mxu0 0.0
    %498 = vmatprep.subr.mxu0 0.0
    %499 = vmatpush2.msra.mxu0 0.0
    %500 = vmatprep.subr.mxu0 0.0
    %501 = vmatpush2.msra.mxu0 0.0
    %502 = vmatprep.subr.mxu0 0.0
    %503 = vmatpush2.msra.mxu0 0.0
    %504 = vmatprep.subr.mxu0 0.0
    %505 = vmatpush2.msra.mxu0 0.0
    %506 = vmatprep.subr.mxu0 0.0
    %507 = vmatpush2.msra.mxu0 0.0
    %508 = vmatprep.subr.mxu0 0.0
    %509 = vmatpush2.msra.mxu0 0.0
    %510 = vmatprep.subr.mxu0 0.0
    %511 = vmatpush2.msra.mxu0 0.0
    %512 = vmatprep.mubr.f32.mxu0 0.0
    %513 = vmatmul.mubr.f32.gmra.mxu0 %v202
    %v514 = vpop.f32.mrf.mxu0
    %v515 = vadd.f32 0.0, %v514
    %v516 = vpop.f32.mrf.mxu0
    %v517 = vadd.f32 0.0, %v516
    %518 = vmatprep.mubr.f32.mxu0 0.0
    %519 = vmatmul.mubr.f32.gmra.mxu0 %v205
    %v520 = vpop.f32.mrf.mxu0
    %v521 = vadd.f32 0.0, %v520
    %v522 = vpop.f32.mrf.mxu0
    %v523 = vadd.f32 0.0, %v522
    %524 = vmatprep.mubr.f32.mxu0 0.0
    %525 = vmatmul.mubr.f32.gmra.mxu0 %v208
    %v526 = vpop.f32.mrf.mxu0
    %v527 = vadd.f32 0.0, %v526
    %v528 = vpop.f32.mrf.mxu0
    %v529 = vadd.f32 0.0, %v528
    %530 = vmatprep.mubr.f32.mxu0 0.0
    %531 = vmatmul.mubr.f32.gmra.mxu0 %v211
    %v532 = vpop.f32.mrf.mxu0
    %v533 = vadd.f32 0.0, %v532
    %v534 = vpop.f32.mrf.mxu0
    %v535 = vadd.f32 0.0, %v534
    %536 = vdwg.mxu0
    %v537 = vmul.f32 %v440, %v515
    %v538 = vmul.f32 %v441, %v517
    %v539 = vmul.f32 %v442, %v521
    %v540 = vmul.f32 %v443, %v523
    %v541 = vmul.f32 %v444, %v527
    %v542 = vmul.f32 %v445, %v529
    %v543 = vmul.f32 %v446, %v533
    %v544 = vmul.f32 %v447, %v535
    %v545 = vadd.f32 %v537, %v539
    %v546 = vadd.f32 %v545, %v541
    %v547 = vadd.f32 %v546, %v543
    %v548 = vrot.slane %v547, 4
    %v549 = vadd.f32 %v547, %v548
    %v550 = vrot.slane %v549, 2
    %v551 = vadd.f32 %v549, %v550
    %v552 = vrot.slane %v551, 1
    %v553 = vadd.f32 %v551, %v552
    %v554 = vadd.f32 %v538, %v540
    %v555 = vadd.f32 %v554, %v542
    %v556 = vadd.f32 %v555, %v544
    %v557 = vrot.slane %v556, 4
    %v558 = vadd.f32 %v556, %v557
    %v559 = vrot.slane %v558, 2
    %v560 = vadd.f32 %v558, %v559
    %v561 = vrot.slane %v560, 1
    %v562 = vadd.f32 %v560, %v561
    %vm563 = vcmp.eq.s32.totalorder %v59, 1
    %v564 = vsel %vm563, %v553, %v329
    %v565 = vsel %vm563, %v562, %v330
    %s566 = sadd.s32 0, 2
    %s567 = sshra.s32 %s566, 3
    %s568 = sand.u32 %s566, 7
    %s569 = sshra.s32 %s566, 3
    %s570 = sand.u32 %s566, 7
    %s571 = smul.u32 %s567, 4
    %s572 = smul.u32 %s571, 8
    %s573 = sadd.s32 %s572, %s570
    %s574 = scalar_lea.vmem [#allocation2], %s573
    %v575 = vld [vmem:[%s574] ss:$8 sm:$0x3]
    %s576 = sadd.s32 %s571, 2
    %s577 = smul.u32 %s576, 8
    %s578 = sadd.s32 %s577, %s570
    %s579 = scalar_lea.vmem [#allocation2], %s578
    %v580 = vld [vmem:[%s579] ss:$8 sm:$0x3]
    %v582 = vlaneseq
    %v583 = vshrl.u32 %v582, 7
    %v584 = vsub.s32 0, %v583
    %v585 = vrot.slane %v575, %v584
    %v586 = vlaneseq
    %v587 = vshrl.u32 %v586, 7
    %v588 = vsub.s32 1, %v587
    %v589 = vrot.slane %v575, %v588
    %v592 = vmul.f32 %v585, %v66
    %v593 = vmul.f32 %v589, %v67
    %v594 = vmul.f32 %v585, %v68
    %v595 = vmul.f32 %v589, %v69
    %v596 = vmul.f32 %v585, %v70
    %v597 = vmul.f32 %v589, %v71
    %v598 = vmul.f32 %v585, %v72
    %v599 = vmul.f32 %v589, %v73
    %v600 = vsub.f32 %v592, %v93
    %v601 = vsub.f32 %v593, %v94
    %v602 = vsub.f32 %v594, %v95
    %v603 = vsub.f32 %v595, %v96
    %v604 = vsub.f32 %v596, %v97
    %v605 = vsub.f32 %v597, %v98
    %v606 = vsub.f32 %v598, %v99
    %v607 = vsub.f32 %v599, %v100
    %v608 = vand.u32 2147483647, %v600
    %v609 = vand.u32 2147483647, %v601
    %v610 = vand.u32 2147483647, %v602
    %v611 = vand.u32 2147483647, %v603
    %v612 = vand.u32 2147483647, %v604
    %v613 = vand.u32 2147483647, %v605
    %v614 = vand.u32 2147483647, %v606
    %v615 = vand.u32 2147483647, %v607
    %v616 = vsub.f32 1.0, %v608
    %v617 = vsub.f32 1.0, %v609
    %v618 = vsub.f32 1.0, %v610
    %v619 = vsub.f32 1.0, %v611
    %v620 = vsub.f32 1.0, %v612
    %v621 = vsub.f32 1.0, %v613
    %v622 = vsub.f32 1.0, %v614
    %v623 = vsub.f32 1.0, %v615
    %v624 = vmax.f32 %v616, 0.0
    %v625 = vmax.f32 %v617, 0.0
    %v626 = vmax.f32 %v618, 0.0
    %v627 = vmax.f32 %v619, 0.0
    %v628 = vmax.f32 %v620, 0.0
    %v629 = vmax.f32 %v621, 0.0
    %v630 = vmax.f32 %v622, 0.0
    %v631 = vmax.f32 %v623, 0.0
    %v633 = vlaneseq
    %v634 = vshrl.u32 %v633, 7
    %v635 = vsub.s32 0, %v634
    %v636 = vrot.slane %v580, %v635
    %v637 = vlaneseq
    %v638 = vshrl.u32 %v637, 7
    %v639 = vsub.s32 1, %v638
    %v640 = vrot.slane %v580, %v639
    %v643 = vmul.f32 %v636, %v133
    %v644 = vmul.f32 %v640, %v134
    %v645 = vmul.f32 %v636, %v135
    %v646 = vmul.f32 %v640, %v136
    %v647 = vmul.f32 %v636, %v137
    %v648 = vmul.f32 %v640, %v138
    %v649 = vmul.f32 %v636, %v139
    %v650 = vmul.f32 %v640, %v140
    %v651 = vsub.f32 %v643, %v160
    %v652 = vsub.f32 %v644, %v161
    %v653 = vsub.f32 %v645, %v162
    %v654 = vsub.f32 %v646, %v163
    %v655 = vsub.f32 %v647, %v164
    %v656 = vsub.f32 %v648, %v165
    %v657 = vsub.f32 %v649, %v166
    %v658 = vsub.f32 %v650, %v167
    %v659 = vand.u32 2147483647, %v651
    %v660 = vand.u32 2147483647, %v652
    %v661 = vand.u32 2147483647, %v653
    %v662 = vand.u32 2147483647, %v654
    %v663 = vand.u32 2147483647, %v655
    %v664 = vand.u32 2147483647, %v656
    %v665 = vand.u32 2147483647, %v657
    %v666 = vand.u32 2147483647, %v658
    %v667 = vsub.f32 1.0, %v659
    %v668 = vsub.f32 1.0, %v660
    %v669 = vsub.f32 1.0, %v661
    %v670 = vsub.f32 1.0, %v662
    %v671 = vsub.f32 1.0, %v663
    %v672 = vsub.f32 1.0, %v664
    %v673 = vsub.f32 1.0, %v665
    %v674 = vsub.f32 1.0, %v666
    %v675 = vmax.f32 %v667, 0.0
    %v676 = vmax.f32 %v668, 0.0
    %v677 = vmax.f32 %v669, 0.0
    %v678 = vmax.f32 %v670, 0.0
    %v679 = vmax.f32 %v671, 0.0
    %v680 = vmax.f32 %v672, 0.0
    %v681 = vmax.f32 %v673, 0.0
    %v682 = vmax.f32 %v674, 0.0
    %683 = vmatprep.subr.mxu0 0.0
    %684 = vmatpush1.msra.mxu0 0.0
    %685 = vmatprep.subr.mxu0 0.0
    %686 = vmatpush1.msra.mxu0 0.0
    %687 = vmatprep.subr.mxu0 0.0
    %688 = vmatpush1.msra.mxu0 0.0
    %689 = vmatprep.subr.mxu0 0.0
    %690 = vmatpush1.msra.mxu0 0.0
    %691 = vmatprep.subr.mxu0 0.0
    %692 = vmatpush1.msra.mxu0 0.0
    %693 = vmatprep.subr.mxu0 0.0
    %694 = vmatpush1.msra.mxu0 0.0
    %695 = vmatprep.subr.mxu0 0.0
    %696 = vmatpush1.msra.mxu0 0.0
    %697 = vmatprep.subr.mxu0 0.0
    %698 = vmatpush1.msra.mxu0 0.0
    %699 = vmatprep.subr.mxu0 0.0
    %700 = vmatpush1.msra.mxu0 0.0
    %701 = vmatprep.subr.mxu0 0.0
    %702 = vmatpush1.msra.mxu0 0.0
    %703 = vmatprep.subr.mxu0 0.0
    %704 = vmatpush1.msra.mxu0 0.0
    %705 = vmatprep.subr.mxu0 0.0
    %706 = vmatpush1.msra.mxu0 0.0
    %707 = vmatprep.subr.mxu0 %v631
    %708 = vmatpush1.msra.mxu0 %v630
    %709 = vmatprep.subr.mxu0 %v629
    %710 = vmatpush1.msra.mxu0 %v628
    %711 = vmatprep.subr.mxu0 %v627
    %712 = vmatpush1.msra.mxu0 %v626
    %713 = vmatprep.subr.mxu0 %v625
    %714 = vmatpush1.msra.mxu0 %v624
    %715 = vmatprep.subr.mxu0 0.0
    %716 = vmatpush2.msra.mxu0 0.0
    %717 = vmatprep.subr.mxu0 0.0
    %718 = vmatpush2.msra.mxu0 0.0
    %719 = vmatprep.subr.mxu0 0.0
    %720 = vmatpush2.msra.mxu0 0.0
    %721 = vmatprep.subr.mxu0 0.0
    %722 = vmatpush2.msra.mxu0 0.0
    %723 = vmatprep.subr.mxu0 0.0
    %724 = vmatpush2.msra.mxu0 0.0
    %725 = vmatprep.subr.mxu0 0.0
    %726 = vmatpush2.msra.mxu0 0.0
    %727 = vmatprep.subr.mxu0 0.0
    %728 = vmatpush2.msra.mxu0 0.0
    %729 = vmatprep.subr.mxu0 0.0
    %730 = vmatpush2.msra.mxu0 0.0
    %731 = vmatprep.subr.mxu0 0.0
    %732 = vmatpush2.msra.mxu0 0.0
    %733 = vmatprep.subr.mxu0 0.0
    %734 = vmatpush2.msra.mxu0 0.0
    %735 = vmatprep.subr.mxu0 0.0
    %736 = vmatpush2.msra.mxu0 0.0
    %737 = vmatprep.subr.mxu0 0.0
    %738 = vmatpush2.msra.mxu0 0.0
    %739 = vmatprep.subr.mxu0 0.0
    %740 = vmatpush2.msra.mxu0 0.0
    %741 = vmatprep.subr.mxu0 0.0
    %742 = vmatpush2.msra.mxu0 0.0
    %743 = vmatprep.subr.mxu0 0.0
    %744 = vmatpush2.msra.mxu0 0.0
    %745 = vmatprep.subr.mxu0 0.0
    %746 = vmatpush2.msra.mxu0 0.0
    %747 = vmatprep.mubr.f32.mxu0 0.0
    %748 = vmatmul.mubr.f32.gmra.mxu0 %v202
    %v749 = vpop.f32.mrf.mxu0
    %v750 = vadd.f32 0.0, %v749
    %v751 = vpop.f32.mrf.mxu0
    %v752 = vadd.f32 0.0, %v751
    %753 = vmatprep.mubr.f32.mxu0 0.0
    %754 = vmatmul.mubr.f32.gmra.mxu0 %v205
    %v755 = vpop.f32.mrf.mxu0
    %v756 = vadd.f32 0.0, %v755
    %v757 = vpop.f32.mrf.mxu0
    %v758 = vadd.f32 0.0, %v757
    %759 = vmatprep.mubr.f32.mxu0 0.0
    %760 = vmatmul.mubr.f32.gmra.mxu0 %v208
    %v761 = vpop.f32.mrf.mxu0
    %v762 = vadd.f32 0.0, %v761
    %v763 = vpop.f32.mrf.mxu0
    %v764 = vadd.f32 0.0, %v763
    %765 = vmatprep.mubr.f32.mxu0 0.0
    %766 = vmatmul.mubr.f32.gmra.mxu0 %v211
    %v767 = vpop.f32.mrf.mxu0
    %v768 = vadd.f32 0.0, %v767
    %v769 = vpop.f32.mrf.mxu0
    %v770 = vadd.f32 0.0, %v769
    %771 = vdwg.mxu0
    %v772 = vmul.f32 %v675, %v750
    %v773 = vmul.f32 %v676, %v752
    %v774 = vmul.f32 %v677, %v756
    %v775 = vmul.f32 %v678, %v758
    %v776 = vmul.f32 %v679, %v762
    %v777 = vmul.f32 %v680, %v764
    %v778 = vmul.f32 %v681, %v768
    %v779 = vmul.f32 %v682, %v770
    %v780 = vadd.f32 %v772, %v774
    %v781 = vadd.f32 %v780, %v776
    %v782 = vadd.f32 %v781, %v778
    %v783 = vrot.slane %v782, 4
    %v784 = vadd.f32 %v782, %v783
    %v785 = vrot.slane %v784, 2
    %v786 = vadd.f32 %v784, %v785
    %v787 = vrot.slane %v786, 1
    %v788 = vadd.f32 %v786, %v787
    %v789 = vadd.f32 %v773, %v775
    %v790 = vadd.f32 %v789, %v777
    %v791 = vadd.f32 %v790, %v779
    %v792 = vrot.slane %v791, 4
    %v793 = vadd.f32 %v791, %v792
    %v794 = vrot.slane %v793, 2
    %v795 = vadd.f32 %v793, %v794
    %v796 = vrot.slane %v795, 1
    %v797 = vadd.f32 %v795, %v796
    %vm798 = vcmp.eq.s32.totalorder %v59, 2
    %v799 = vsel %vm798, %v788, %v564
    %v800 = vsel %vm798, %v797, %v565
    %s801 = sadd.s32 0, 3
    %s802 = sshra.s32 %s801, 3
    %s803 = sand.u32 %s801, 7
    %s804 = sshra.s32 %s801, 3
    %s805 = sand.u32 %s801, 7
    %s806 = smul.u32 %s802, 4
    %s807 = smul.u32 %s806, 8
    %s808 = sadd.s32 %s807, %s805
    %s809 = scalar_lea.vmem [#allocation2], %s808
    %v810 = vld [vmem:[%s809] ss:$8 sm:$0x3]
    %s811 = sadd.s32 %s806, 2
    %s812 = smul.u32 %s811, 8
    %s813 = sadd.s32 %s812, %s805
    %s814 = scalar_lea.vmem [#allocation2], %s813
    %v815 = vld [vmem:[%s814] ss:$8 sm:$0x3]
    %v817 = vlaneseq
    %v818 = vshrl.u32 %v817, 7
    %v819 = vsub.s32 0, %v818
    %v820 = vrot.slane %v810, %v819
    %v821 = vlaneseq
    %v822 = vshrl.u32 %v821, 7
    %v823 = vsub.s32 1, %v822
    %v824 = vrot.slane %v810, %v823
    %v827 = vmul.f32 %v820, %v66
    %v828 = vmul.f32 %v824, %v67
    %v829 = vmul.f32 %v820, %v68
    %v830 = vmul.f32 %v824, %v69
    %v831 = vmul.f32 %v820, %v70
    %v832 = vmul.f32 %v824, %v71
    %v833 = vmul.f32 %v820, %v72
    %v834 = vmul.f32 %v824, %v73
    %v835 = vsub.f32 %v827, %v93
    %v836 = vsub.f32 %v828, %v94
    %v837 = vsub.f32 %v829, %v95
    %v838 = vsub.f32 %v830, %v96
    %v839 = vsub.f32 %v831, %v97
    %v840 = vsub.f32 %v832, %v98
    %v841 = vsub.f32 %v833, %v99
    %v842 = vsub.f32 %v834, %v100
    %v843 = vand.u32 2147483647, %v835
    %v844 = vand.u32 2147483647, %v836
    %v845 = vand.u32 2147483647, %v837
    %v846 = vand.u32 2147483647, %v838
    %v847 = vand.u32 2147483647, %v839
    %v848 = vand.u32 2147483647, %v840
    %v849 = vand.u32 2147483647, %v841
    %v850 = vand.u32 2147483647, %v842
    %v851 = vsub.f32 1.0, %v843
    %v852 = vsub.f32 1.0, %v844
    %v853 = vsub.f32 1.0, %v845
    %v854 = vsub.f32 1.0, %v846
    %v855 = vsub.f32 1.0, %v847
    %v856 = vsub.f32 1.0, %v848
    %v857 = vsub.f32 1.0, %v849
    %v858 = vsub.f32 1.0, %v850
    %v859 = vmax.f32 %v851, 0.0
    %v860 = vmax.f32 %v852, 0.0
    %v861 = vmax.f32 %v853, 0.0
    %v862 = vmax.f32 %v854, 0.0
    %v863 = vmax.f32 %v855, 0.0
    %v864 = vmax.f32 %v856, 0.0
    %v865 = vmax.f32 %v857, 0.0
    %v866 = vmax.f32 %v858, 0.0
    %v868 = vlaneseq
    %v869 = vshrl.u32 %v868, 7
    %v870 = vsub.s32 0, %v869
    %v871 = vrot.slane %v815, %v870
    %v872 = vlaneseq
    %v873 = vshrl.u32 %v872, 7
    %v874 = vsub.s32 1, %v873
    %v875 = vrot.slane %v815, %v874
    %v878 = vmul.f32 %v871, %v133
    %v879 = vmul.f32 %v875, %v134
    %v880 = vmul.f32 %v871, %v135
    %v881 = vmul.f32 %v875, %v136
    %v882 = vmul.f32 %v871, %v137
    %v883 = vmul.f32 %v875, %v138
    %v884 = vmul.f32 %v871, %v139
    %v885 = vmul.f32 %v875, %v140
    %v886 = vsub.f32 %v878, %v160
    %v887 = vsub.f32 %v879, %v161
    %v888 = vsub.f32 %v880, %v162
    %v889 = vsub.f32 %v881, %v163
    %v890 = vsub.f32 %v882, %v164
    %v891 = vsub.f32 %v883, %v165
    %v892 = vsub.f32 %v884, %v166
    %v893 = vsub.f32 %v885, %v167
    %v894 = vand.u32 2147483647, %v886
    %v895 = vand.u32 2147483647, %v887
    %v896 = vand.u32 2147483647, %v888
    %v897 = vand.u32 2147483647, %v889
    %v898 = vand.u32 2147483647, %v890
    %v899 = vand.u32 2147483647, %v891
    %v900 = vand.u32 2147483647, %v892
    %v901 = vand.u32 2147483647, %v893
    %v902 = vsub.f32 1.0, %v894
    %v903 = vsub.f32 1.0, %v895
    %v904 = vsub.f32 1.0, %v896
    %v905 = vsub.f32 1.0, %v897
    %v906 = vsub.f32 1.0, %v898
    %v907 = vsub.f32 1.0, %v899
    %v908 = vsub.f32 1.0, %v900
    %v909 = vsub.f32 1.0, %v901
    %v910 = vmax.f32 %v902, 0.0
    %v911 = vmax.f32 %v903, 0.0
    %v912 = vmax.f32 %v904, 0.0
    %v913 = vmax.f32 %v905, 0.0
    %v914 = vmax.f32 %v906, 0.0
    %v915 = vmax.f32 %v907, 0.0
    %v916 = vmax.f32 %v908, 0.0
    %v917 = vmax.f32 %v909, 0.0
    %918 = vmatprep.subr.mxu0 0.0
    %919 = vmatpush1.msra.mxu0 0.0
    %920 = vmatprep.subr.mxu0 0.0
    %921 = vmatpush1.msra.mxu0 0.0
    %922 = vmatprep.subr.mxu0 0.0
    %923 = vmatpush1.msra.mxu0 0.0
    %924 = vmatprep.subr.mxu0 0.0
    %925 = vmatpush1.msra.mxu0 0.0
    %926 = vmatprep.subr.mxu0 0.0
    %927 = vmatpush1.msra.mxu0 0.0
    %928 = vmatprep.subr.mxu0 0.0
    %929 = vmatpush1.msra.mxu0 0.0
    %930 = vmatprep.subr.mxu0 0.0
    %931 = vmatpush1.msra.mxu0 0.0
    %932 = vmatprep.subr.mxu0 0.0
    %933 = vmatpush1.msra.mxu0 0.0
    %934 = vmatprep.subr.mxu0 0.0
    %935 = vmatpush1.msra.mxu0 0.0
    %936 = vmatprep.subr.mxu0 0.0
    %937 = vmatpush1.msra.mxu0 0.0
    %938 = vmatprep.subr.mxu0 0.0
    %939 = vmatpush1.msra.mxu0 0.0
    %940 = vmatprep.subr.mxu0 0.0
    %941 = vmatpush1.msra.mxu0 0.0
    %942 = vmatprep.subr.mxu0 %v866
    %943 = vmatpush1.msra.mxu0 %v865
    %944 = vmatprep.subr.mxu0 %v864
    %945 = vmatpush1.msra.mxu0 %v863
    %946 = vmatprep.subr.mxu0 %v862
    %947 = vmatpush1.msra.mxu0 %v861
    %948 = vmatprep.subr.mxu0 %v860
    %949 = vmatpush1.msra.mxu0 %v859
    %950 = vmatprep.subr.mxu0 0.0
    %951 = vmatpush2.msra.mxu0 0.0
    %952 = vmatprep.subr.mxu0 0.0
    %953 = vmatpush2.msra.mxu0 0.0
    %954 = vmatprep.subr.mxu0 0.0
    %955 = vmatpush2.msra.mxu0 0.0
    %956 = vmatprep.subr.mxu0 0.0
    %957 = vmatpush2.msra.mxu0 0.0
    %958 = vmatprep.subr.mxu0 0.0
    %959 = vmatpush2.msra.mxu0 0.0
    %960 = vmatprep.subr.mxu0 0.0
    %961 = vmatpush2.msra.mxu0 0.0
    %962 = vmatprep.subr.mxu0 0.0
    %963 = vmatpush2.msra.mxu0 0.0
    %964 = vmatprep.subr.mxu0 0.0
    %965 = vmatpush2.msra.mxu0 0.0
    %966 = vmatprep.subr.mxu0 0.0
    %967 = vmatpush2.msra.mxu0 0.0
    %968 = vmatprep.subr.mxu0 0.0
    %969 = vmatpush2.msra.mxu0 0.0
    %970 = vmatprep.subr.mxu0 0.0
    %971 = vmatpush2.msra.mxu0 0.0
    %972 = vmatprep.subr.mxu0 0.0
    %973 = vmatpush2.msra.mxu0 0.0
    %974 = vmatprep.subr.mxu0 0.0
    %975 = vmatpush2.msra.mxu0 0.0
    %976 = vmatprep.subr.mxu0 0.0
    %977 = vmatpush2.msra.mxu0 0.0
    %978 = vmatprep.subr.mxu0 0.0
    %979 = vmatpush2.msra.mxu0 0.0
    %980 = vmatprep.subr.mxu0 0.0
    %981 = vmatpush2.msra.mxu0 0.0
    %982 = vmatprep.mubr.f32.mxu0 0.0
    %983 = vmatmul.mubr.f32.gmra.mxu0 %v202
    %v984 = vpop.f32.mrf.mxu0
    %v985 = vadd.f32 0.0, %v984
    %v986 = vpop.f32.mrf.mxu0
    %v987 = vadd.f32 0.0, %v986
    %988 = vmatprep.mubr.f32.mxu0 0.0
    %989 = vmatmul.mubr.f32.gmra.mxu0 %v205
    %v990 = vpop.f32.mrf.mxu0
    %v991 = vadd.f32 0.0, %v990
    %v992 = vpop.f32.mrf.mxu0
    %v993 = vadd.f32 0.0, %v992
    %994 = vmatprep.mubr.f32.mxu0 0.0
    %995 = vmatmul.mubr.f32.gmra.mxu0 %v208
    %v996 = vpop.f32.mrf.mxu0
    %v997 = vadd.f32 0.0, %v996
    %v998 = vpop.f32.mrf.mxu0
    %v999 = vadd.f32 0.0, %v998
    %1000 = vmatprep.mubr.f32.mxu0 0.0
    %1001 = vmatmul.mubr.f32.gmra.mxu0 %v211
    %v1002 = vpop.f32.mrf.mxu0
    %v1003 = vadd.f32 0.0, %v1002
    %v1004 = vpop.f32.mrf.mxu0
    %v1005 = vadd.f32 0.0, %v1004
    %1006 = vdwg.mxu0
    %v1007 = vmul.f32 %v910, %v985
    %v1008 = vmul.f32 %v911, %v987
    %v1009 = vmul.f32 %v912, %v991
    %v1010 = vmul.f32 %v913, %v993
    %v1011 = vmul.f32 %v914, %v997
    %v1012 = vmul.f32 %v915, %v999
    %v1013 = vmul.f32 %v916, %v1003
    %v1014 = vmul.f32 %v917, %v1005
    %v1015 = vadd.f32 %v1007, %v1009
    %v1016 = vadd.f32 %v1015, %v1011
    %v1017 = vadd.f32 %v1016, %v1013
    %v1018 = vrot.slane %v1017, 4
    %v1019 = vadd.f32 %v1017, %v1018
    %v1020 = vrot.slane %v1019, 2
    %v1021 = vadd.f32 %v1019, %v1020
    %v1022 = vrot.slane %v1021, 1
    %v1023 = vadd.f32 %v1021, %v1022
    %v1024 = vadd.f32 %v1008, %v1010
    %v1025 = vadd.f32 %v1024, %v1012
    %v1026 = vadd.f32 %v1025, %v1014
    %v1027 = vrot.slane %v1026, 4
    %v1028 = vadd.f32 %v1026, %v1027
    %v1029 = vrot.slane %v1028, 2
    %v1030 = vadd.f32 %v1028, %v1029
    %v1031 = vrot.slane %v1030, 1
    %v1032 = vadd.f32 %v1030, %v1031
    %vm1033 = vcmp.eq.s32.totalorder %v59, 3
    %v1034 = vsel %vm1033, %v1023, %v799
    %v1035 = vsel %vm1033, %v1032, %v800
    %s1036 = sadd.s32 0, 4
    %s1037 = sshra.s32 %s1036, 3
    %s1038 = sand.u32 %s1036, 7
    %s1039 = sshra.s32 %s1036, 3
    %s1040 = sand.u32 %s1036, 7
    %s1041 = smul.u32 %s1037, 4
    %s1042 = smul.u32 %s1041, 8
    %s1043 = sadd.s32 %s1042, %s1040
    %s1044 = scalar_lea.vmem [#allocation2], %s1043
    %v1045 = vld [vmem:[%s1044] ss:$8 sm:$0x3]
    %s1046 = sadd.s32 %s1041, 2
    %s1047 = smul.u32 %s1046, 8
    %s1048 = sadd.s32 %s1047, %s1040
    %s1049 = scalar_lea.vmem [#allocation2], %s1048
    %v1050 = vld [vmem:[%s1049] ss:$8 sm:$0x3]
    %v1052 = vlaneseq
    %v1053 = vshrl.u32 %v1052, 7
    %v1054 = vsub.s32 0, %v1053
    %v1055 = vrot.slane %v1045, %v1054
    %v1056 = vlaneseq
    %v1057 = vshrl.u32 %v1056, 7
    %v1058 = vsub.s32 1, %v1057
    %v1059 = vrot.slane %v1045, %v1058
    %v1062 = vmul.f32 %v1055, %v66
    %v1063 = vmul.f32 %v1059, %v67
    %v1064 = vmul.f32 %v1055, %v68
    %v1065 = vmul.f32 %v1059, %v69
    %v1066 = vmul.f32 %v1055, %v70
    %v1067 = vmul.f32 %v1059, %v71
    %v1068 = vmul.f32 %v1055, %v72
    %v1069 = vmul.f32 %v1059, %v73
    %v1070 = vsub.f32 %v1062, %v93
    %v1071 = vsub.f32 %v1063, %v94
    %v1072 = vsub.f32 %v1064, %v95
    %v1073 = vsub.f32 %v1065, %v96
    %v1074 = vsub.f32 %v1066, %v97
    %v1075 = vsub.f32 %v1067, %v98
    %v1076 = vsub.f32 %v1068, %v99
    %v1077 = vsub.f32 %v1069, %v100
    %v1078 = vand.u32 2147483647, %v1070
    %v1079 = vand.u32 2147483647, %v1071
    %v1080 = vand.u32 2147483647, %v1072
    %v1081 = vand.u32 2147483647, %v1073
    %v1082 = vand.u32 2147483647, %v1074
    %v1083 = vand.u32 2147483647, %v1075
    %v1084 = vand.u32 2147483647, %v1076
    %v1085 = vand.u32 2147483647, %v1077
    %v1086 = vsub.f32 1.0, %v1078
    %v1087 = vsub.f32 1.0, %v1079
    %v1088 = vsub.f32 1.0, %v1080
    %v1089 = vsub.f32 1.0, %v1081
    %v1090 = vsub.f32 1.0, %v1082
    %v1091 = vsub.f32 1.0, %v1083
    %v1092 = vsub.f32 1.0, %v1084
    %v1093 = vsub.f32 1.0, %v1085
    %v1094 = vmax.f32 %v1086, 0.0
    %v1095 = vmax.f32 %v1087, 0.0
    %v1096 = vmax.f32 %v1088, 0.0
    %v1097 = vmax.f32 %v1089, 0.0
    %v1098 = vmax.f32 %v1090, 0.0
    %v1099 = vmax.f32 %v1091, 0.0
    %v1100 = vmax.f32 %v1092, 0.0
    %v1101 = vmax.f32 %v1093, 0.0
    %v1103 = vlaneseq
    %v1104 = vshrl.u32 %v1103, 7
    %v1105 = vsub.s32 0, %v1104
    %v1106 = vrot.slane %v1050, %v1105
    %v1107 = vlaneseq
    %v1108 = vshrl.u32 %v1107, 7
    %v1109 = vsub.s32 1, %v1108
    %v1110 = vrot.slane %v1050, %v1109
    %v1113 = vmul.f32 %v1106, %v133
    %v1114 = vmul.f32 %v1110, %v134
    %v1115 = vmul.f32 %v1106, %v135
    %v1116 = vmul.f32 %v1110, %v136
    %v1117 = vmul.f32 %v1106, %v137
    %v1118 = vmul.f32 %v1110, %v138
    %v1119 = vmul.f32 %v1106, %v139
    %v1120 = vmul.f32 %v1110, %v140
    %v1121 = vsub.f32 %v1113, %v160
    %v1122 = vsub.f32 %v1114, %v161
    %v1123 = vsub.f32 %v1115, %v162
    %v1124 = vsub.f32 %v1116, %v163
    %v1125 = vsub.f32 %v1117, %v164
    %v1126 = vsub.f32 %v1118, %v165
    %v1127 = vsub.f32 %v1119, %v166
    %v1128 = vsub.f32 %v1120, %v167
    %v1129 = vand.u32 2147483647, %v1121
    %v1130 = vand.u32 2147483647, %v1122
    %v1131 = vand.u32 2147483647, %v1123
    %v1132 = vand.u32 2147483647, %v1124
    %v1133 = vand.u32 2147483647, %v1125
    %v1134 = vand.u32 2147483647, %v1126
    %v1135 = vand.u32 2147483647, %v1127
    %v1136 = vand.u32 2147483647, %v1128
    %v1137 = vsub.f32 1.0, %v1129
    %v1138 = vsub.f32 1.0, %v1130
    %v1139 = vsub.f32 1.0, %v1131
    %v1140 = vsub.f32 1.0, %v1132
    %v1141 = vsub.f32 1.0, %v1133
    %v1142 = vsub.f32 1.0, %v1134
    %v1143 = vsub.f32 1.0, %v1135
    %v1144 = vsub.f32 1.0, %v1136
    %v1145 = vmax.f32 %v1137, 0.0
    %v1146 = vmax.f32 %v1138, 0.0
    %v1147 = vmax.f32 %v1139, 0.0
    %v1148 = vmax.f32 %v1140, 0.0
    %v1149 = vmax.f32 %v1141, 0.0
    %v1150 = vmax.f32 %v1142, 0.0
    %v1151 = vmax.f32 %v1143, 0.0
    %v1152 = vmax.f32 %v1144, 0.0
    %1153 = vmatprep.subr.mxu0 0.0
    %1154 = vmatpush1.msra.mxu0 0.0
    %1155 = vmatprep.subr.mxu0 0.0
    %1156 = vmatpush1.msra.mxu0 0.0
    %1157 = vmatprep.subr.mxu0 0.0
    %1158 = vmatpush1.msra.mxu0 0.0
    %1159 = vmatprep.subr.mxu0 0.0
    %1160 = vmatpush1.msra.mxu0 0.0
    %1161 = vmatprep.subr.mxu0 0.0
    %1162 = vmatpush1.msra.mxu0 0.0
    %1163 = vmatprep.subr.mxu0 0.0
    %1164 = vmatpush1.msra.mxu0 0.0
    %1165 = vmatprep.subr.mxu0 0.0
    %1166 = vmatpush1.msra.mxu0 0.0
    %1167 = vmatprep.subr.mxu0 0.0
    %1168 = vmatpush1.msra.mxu0 0.0
    %1169 = vmatprep.subr.mxu0 0.0
    %1170 = vmatpush1.msra.mxu0 0.0
    %1171 = vmatprep.subr.mxu0 0.0
    %1172 = vmatpush1.msra.mxu0 0.0
    %1173 = vmatprep.subr.mxu0 0.0
    %1174 = vmatpush1.msra.mxu0 0.0
    %1175 = vmatprep.subr.mxu0 0.0
    %1176 = vmatpush1.msra.mxu0 0.0
    %1177 = vmatprep.subr.mxu0 %v1101
    %1178 = vmatpush1.msra.mxu0 %v1100
    %1179 = vmatprep.subr.mxu0 %v1099
    %1180 = vmatpush1.msra.mxu0 %v1098
    %1181 = vmatprep.subr.mxu0 %v1097
    %1182 = vmatpush1.msra.mxu0 %v1096
    %1183 = vmatprep.subr.mxu0 %v1095
    %1184 = vmatpush1.msra.mxu0 %v1094
    %1185 = vmatprep.subr.mxu0 0.0
    %1186 = vmatpush2.msra.mxu0 0.0
    %1187 = vmatprep.subr.mxu0 0.0
    %1188 = vmatpush2.msra.mxu0 0.0
    %1189 = vmatprep.subr.mxu0 0.0
    %1190 = vmatpush2.msra.mxu0 0.0
    %1191 = vmatprep.subr.mxu0 0.0
    %1192 = vmatpush2.msra.mxu0 0.0
    %1193 = vmatprep.subr.mxu0 0.0
    %1194 = vmatpush2.msra.mxu0 0.0
    %1195 = vmatprep.subr.mxu0 0.0
    %1196 = vmatpush2.msra.mxu0 0.0
    %1197 = vmatprep.subr.mxu0 0.0
    %1198 = vmatpush2.msra.mxu0 0.0
    %1199 = vmatprep.subr.mxu0 0.0
    %1200 = vmatpush2.msra.mxu0 0.0
    %1201 = vmatprep.subr.mxu0 0.0
    %1202 = vmatpush2.msra.mxu0 0.0
    %1203 = vmatprep.subr.mxu0 0.0
    %1204 = vmatpush2.msra.mxu0 0.0
    %1205 = vmatprep.subr.mxu0 0.0
    %1206 = vmatpush2.msra.mxu0 0.0
    %1207 = vmatprep.subr.mxu0 0.0
    %1208 = vmatpush2.msra.mxu0 0.0
    %1209 = vmatprep.subr.mxu0 0.0
    %1210 = vmatpush2.msra.mxu0 0.0
    %1211 = vmatprep.subr.mxu0 0.0
    %1212 = vmatpush2.msra.mxu0 0.0
    %1213 = vmatprep.subr.mxu0 0.0
    %1214 = vmatpush2.msra.mxu0 0.0
    %1215 = vmatprep.subr.mxu0 0.0
    %1216 = vmatpush2.msra.mxu0 0.0
    %1217 = vmatprep.mubr.f32.mxu0 0.0
    %1218 = vmatmul.mubr.f32.gmra.mxu0 %v202
    %v1219 = vpop.f32.mrf.mxu0
    %v1220 = vadd.f32 0.0, %v1219
    %v1221 = vpop.f32.mrf.mxu0
    %v1222 = vadd.f32 0.0, %v1221
    %1223 = vmatprep.mubr.f32.mxu0 0.0
    %1224 = vmatmul.mubr.f32.gmra.mxu0 %v205
    %v1225 = vpop.f32.mrf.mxu0
    %v1226 = vadd.f32 0.0, %v1225
    %v1227 = vpop.f32.mrf.mxu0
    %v1228 = vadd.f32 0.0, %v1227
    %1229 = vmatprep.mubr.f32.mxu0 0.0
    %1230 = vmatmul.mubr.f32.gmra.mxu0 %v208
    %v1231 = vpop.f32.mrf.mxu0
    %v1232 = vadd.f32 0.0, %v1231
    %v1233 = vpop.f32.mrf.mxu0
    %v1234 = vadd.f32 0.0, %v1233
    %1235 = vmatprep.mubr.f32.mxu0 0.0
    %1236 = vmatmul.mubr.f32.gmra.mxu0 %v211
    %v1237 = vpop.f32.mrf.mxu0
    %v1238 = vadd.f32 0.0, %v1237
    %v1239 = vpop.f32.mrf.mxu0
    %v1240 = vadd.f32 0.0, %v1239
    %1241 = vdwg.mxu0
    %v1242 = vmul.f32 %v1145, %v1220
    %v1243 = vmul.f32 %v1146, %v1222
    %v1244 = vmul.f32 %v1147, %v1226
    %v1245 = vmul.f32 %v1148, %v1228
    %v1246 = vmul.f32 %v1149, %v1232
    %v1247 = vmul.f32 %v1150, %v1234
    %v1248 = vmul.f32 %v1151, %v1238
    %v1249 = vmul.f32 %v1152, %v1240
    %v1250 = vadd.f32 %v1242, %v1244
    %v1251 = vadd.f32 %v1250, %v1246
    %v1252 = vadd.f32 %v1251, %v1248
    %v1253 = vrot.slane %v1252, 4
    %v1254 = vadd.f32 %v1252, %v1253
    %v1255 = vrot.slane %v1254, 2
    %v1256 = vadd.f32 %v1254, %v1255
    %v1257 = vrot.slane %v1256, 1
    %v1258 = vadd.f32 %v1256, %v1257
    %v1259 = vadd.f32 %v1243, %v1245
    %v1260 = vadd.f32 %v1259, %v1247
    %v1261 = vadd.f32 %v1260, %v1249
    %v1262 = vrot.slane %v1261, 4
    %v1263 = vadd.f32 %v1261, %v1262
    %v1264 = vrot.slane %v1263, 2
    %v1265 = vadd.f32 %v1263, %v1264
    %v1266 = vrot.slane %v1265, 1
    %v1267 = vadd.f32 %v1265, %v1266
    %vm1268 = vcmp.eq.s32.totalorder %v59, 4
    %v1269 = vsel %vm1268, %v1258, %v1034
    %v1270 = vsel %vm1268, %v1267, %v1035
    %s1271 = sadd.s32 0, 5
    %s1272 = sshra.s32 %s1271, 3
    %s1273 = sand.u32 %s1271, 7
    %s1274 = sshra.s32 %s1271, 3
    %s1275 = sand.u32 %s1271, 7
    %s1276 = smul.u32 %s1272, 4
    %s1277 = smul.u32 %s1276, 8
    %s1278 = sadd.s32 %s1277, %s1275
    %s1279 = scalar_lea.vmem [#allocation2], %s1278
    %v1280 = vld [vmem:[%s1279] ss:$8 sm:$0x3]
    %s1281 = sadd.s32 %s1276, 2
    %s1282 = smul.u32 %s1281, 8
    %s1283 = sadd.s32 %s1282, %s1275
    %s1284 = scalar_lea.vmem [#allocation2], %s1283
    %v1285 = vld [vmem:[%s1284] ss:$8 sm:$0x3]
    %v1287 = vlaneseq
    %v1288 = vshrl.u32 %v1287, 7
    %v1289 = vsub.s32 0, %v1288
    %v1290 = vrot.slane %v1280, %v1289
    %v1291 = vlaneseq
    %v1292 = vshrl.u32 %v1291, 7
    %v1293 = vsub.s32 1, %v1292
    %v1294 = vrot.slane %v1280, %v1293
    %v1297 = vmul.f32 %v1290, %v66
    %v1298 = vmul.f32 %v1294, %v67
    %v1299 = vmul.f32 %v1290, %v68
    %v1300 = vmul.f32 %v1294, %v69
    %v1301 = vmul.f32 %v1290, %v70
    %v1302 = vmul.f32 %v1294, %v71
    %v1303 = vmul.f32 %v1290, %v72
    %v1304 = vmul.f32 %v1294, %v73
    %v1305 = vsub.f32 %v1297, %v93
    %v1306 = vsub.f32 %v1298, %v94
    %v1307 = vsub.f32 %v1299, %v95
    %v1308 = vsub.f32 %v1300, %v96
    %v1309 = vsub.f32 %v1301, %v97
    %v1310 = vsub.f32 %v1302, %v98
    %v1311 = vsub.f32 %v1303, %v99
    %v1312 = vsub.f32 %v1304, %v100
    %v1313 = vand.u32 2147483647, %v1305
    %v1314 = vand.u32 2147483647, %v1306
    %v1315 = vand.u32 2147483647, %v1307
    %v1316 = vand.u32 2147483647, %v1308
    %v1317 = vand.u32 2147483647, %v1309
    %v1318 = vand.u32 2147483647, %v1310
    %v1319 = vand.u32 2147483647, %v1311
    %v1320 = vand.u32 2147483647, %v1312
    %v1321 = vsub.f32 1.0, %v1313
    %v1322 = vsub.f32 1.0, %v1314
    %v1323 = vsub.f32 1.0, %v1315
    %v1324 = vsub.f32 1.0, %v1316
    %v1325 = vsub.f32 1.0, %v1317
    %v1326 = vsub.f32 1.0, %v1318
    %v1327 = vsub.f32 1.0, %v1319
    %v1328 = vsub.f32 1.0, %v1320
    %v1329 = vmax.f32 %v1321, 0.0
    %v1330 = vmax.f32 %v1322, 0.0
    %v1331 = vmax.f32 %v1323, 0.0
    %v1332 = vmax.f32 %v1324, 0.0
    %v1333 = vmax.f32 %v1325, 0.0
    %v1334 = vmax.f32 %v1326, 0.0
    %v1335 = vmax.f32 %v1327, 0.0
    %v1336 = vmax.f32 %v1328, 0.0
    %v1338 = vlaneseq
    %v1339 = vshrl.u32 %v1338, 7
    %v1340 = vsub.s32 0, %v1339
    %v1341 = vrot.slane %v1285, %v1340
    %v1342 = vlaneseq
    %v1343 = vshrl.u32 %v1342, 7
    %v1344 = vsub.s32 1, %v1343
    %v1345 = vrot.slane %v1285, %v1344
    %v1348 = vmul.f32 %v1341, %v133
    %v1349 = vmul.f32 %v1345, %v134
    %v1350 = vmul.f32 %v1341, %v135
    %v1351 = vmul.f32 %v1345, %v136
    %v1352 = vmul.f32 %v1341, %v137
    %v1353 = vmul.f32 %v1345, %v138
    %v1354 = vmul.f32 %v1341, %v139
    %v1355 = vmul.f32 %v1345, %v140
    %v1356 = vsub.f32 %v1348, %v160
    %v1357 = vsub.f32 %v1349, %v161
    %v1358 = vsub.f32 %v1350, %v162
    %v1359 = vsub.f32 %v1351, %v163
    %v1360 = vsub.f32 %v1352, %v164
    %v1361 = vsub.f32 %v1353, %v165
    %v1362 = vsub.f32 %v1354, %v166
    %v1363 = vsub.f32 %v1355, %v167
    %v1364 = vand.u32 2147483647, %v1356
    %v1365 = vand.u32 2147483647, %v1357
    %v1366 = vand.u32 2147483647, %v1358
    %v1367 = vand.u32 2147483647, %v1359
    %v1368 = vand.u32 2147483647, %v1360
    %v1369 = vand.u32 2147483647, %v1361
    %v1370 = vand.u32 2147483647, %v1362
    %v1371 = vand.u32 2147483647, %v1363
    %v1372 = vsub.f32 1.0, %v1364
    %v1373 = vsub.f32 1.0, %v1365
    %v1374 = vsub.f32 1.0, %v1366
    %v1375 = vsub.f32 1.0, %v1367
    %v1376 = vsub.f32 1.0, %v1368
    %v1377 = vsub.f32 1.0, %v1369
    %v1378 = vsub.f32 1.0, %v1370
    %v1379 = vsub.f32 1.0, %v1371
    %v1380 = vmax.f32 %v1372, 0.0
    %v1381 = vmax.f32 %v1373, 0.0
    %v1382 = vmax.f32 %v1374, 0.0
    %v1383 = vmax.f32 %v1375, 0.0
    %v1384 = vmax.f32 %v1376, 0.0
    %v1385 = vmax.f32 %v1377, 0.0
    %v1386 = vmax.f32 %v1378, 0.0
    %v1387 = vmax.f32 %v1379, 0.0
    %1388 = vmatprep.subr.mxu0 0.0
    %1389 = vmatpush1.msra.mxu0 0.0
    %1390 = vmatprep.subr.mxu0 0.0
    %1391 = vmatpush1.msra.mxu0 0.0
    %1392 = vmatprep.subr.mxu0 0.0
    %1393 = vmatpush1.msra.mxu0 0.0
    %1394 = vmatprep.subr.mxu0 0.0
    %1395 = vmatpush1.msra.mxu0 0.0
    %1396 = vmatprep.subr.mxu0 0.0
    %1397 = vmatpush1.msra.mxu0 0.0
    %1398 = vmatprep.subr.mxu0 0.0
    %1399 = vmatpush1.msra.mxu0 0.0
    %1400 = vmatprep.subr.mxu0 0.0
    %1401 = vmatpush1.msra.mxu0 0.0
    %1402 = vmatprep.subr.mxu0 0.0
    %1403 = vmatpush1.msra.mxu0 0.0
    %1404 = vmatprep.subr.mxu0 0.0
    %1405 = vmatpush1.msra.mxu0 0.0
    %1406 = vmatprep.subr.mxu0 0.0
    %1407 = vmatpush1.msra.mxu0 0.0
    %1408 = vmatprep.subr.mxu0 0.0
    %1409 = vmatpush1.msra.mxu0 0.0
    %1410 = vmatprep.subr.mxu0 0.0
    %1411 = vmatpush1.msra.mxu0 0.0
    %1412 = vmatprep.subr.mxu0 %v1336
    %1413 = vmatpush1.msra.mxu0 %v1335
    %1414 = vmatprep.subr.mxu0 %v1334
    %1415 = vmatpush1.msra.mxu0 %v1333
    %1416 = vmatprep.subr.mxu0 %v1332
    %1417 = vmatpush1.msra.mxu0 %v1331
    %1418 = vmatprep.subr.mxu0 %v1330
    %1419 = vmatpush1.msra.mxu0 %v1329
    %1420 = vmatprep.subr.mxu0 0.0
    %1421 = vmatpush2.msra.mxu0 0.0
    %1422 = vmatprep.subr.mxu0 0.0
    %1423 = vmatpush2.msra.mxu0 0.0
    %1424 = vmatprep.subr.mxu0 0.0
    %1425 = vmatpush2.msra.mxu0 0.0
    %1426 = vmatprep.subr.mxu0 0.0
    %1427 = vmatpush2.msra.mxu0 0.0
    %1428 = vmatprep.subr.mxu0 0.0
    %1429 = vmatpush2.msra.mxu0 0.0
    %1430 = vmatprep.subr.mxu0 0.0
    %1431 = vmatpush2.msra.mxu0 0.0
    %1432 = vmatprep.subr.mxu0 0.0
    %1433 = vmatpush2.msra.mxu0 0.0
    %1434 = vmatprep.subr.mxu0 0.0
    %1435 = vmatpush2.msra.mxu0 0.0
    %1436 = vmatprep.subr.mxu0 0.0
    %1437 = vmatpush2.msra.mxu0 0.0
    %1438 = vmatprep.subr.mxu0 0.0
    %1439 = vmatpush2.msra.mxu0 0.0
    %1440 = vmatprep.subr.mxu0 0.0
    %1441 = vmatpush2.msra.mxu0 0.0
    %1442 = vmatprep.subr.mxu0 0.0
    %1443 = vmatpush2.msra.mxu0 0.0
    %1444 = vmatprep.subr.mxu0 0.0
    %1445 = vmatpush2.msra.mxu0 0.0
    %1446 = vmatprep.subr.mxu0 0.0
    %1447 = vmatpush2.msra.mxu0 0.0
    %1448 = vmatprep.subr.mxu0 0.0
    %1449 = vmatpush2.msra.mxu0 0.0
    %1450 = vmatprep.subr.mxu0 0.0
    %1451 = vmatpush2.msra.mxu0 0.0
    %1452 = vmatprep.mubr.f32.mxu0 0.0
    %1453 = vmatmul.mubr.f32.gmra.mxu0 %v202
    %v1454 = vpop.f32.mrf.mxu0
    %v1455 = vadd.f32 0.0, %v1454
    %v1456 = vpop.f32.mrf.mxu0
    %v1457 = vadd.f32 0.0, %v1456
    %1458 = vmatprep.mubr.f32.mxu0 0.0
    %1459 = vmatmul.mubr.f32.gmra.mxu0 %v205
    %v1460 = vpop.f32.mrf.mxu0
    %v1461 = vadd.f32 0.0, %v1460
    %v1462 = vpop.f32.mrf.mxu0
    %v1463 = vadd.f32 0.0, %v1462
    %1464 = vmatprep.mubr.f32.mxu0 0.0
    %1465 = vmatmul.mubr.f32.gmra.mxu0 %v208
    %v1466 = vpop.f32.mrf.mxu0
    %v1467 = vadd.f32 0.0, %v1466
    %v1468 = vpop.f32.mrf.mxu0
    %v1469 = vadd.f32 0.0, %v1468
    %1470 = vmatprep.mubr.f32.mxu0 0.0
    %1471 = vmatmul.mubr.f32.gmra.mxu0 %v211
    %v1472 = vpop.f32.mrf.mxu0
    %v1473 = vadd.f32 0.0, %v1472
    %v1474 = vpop.f32.mrf.mxu0
    %v1475 = vadd.f32 0.0, %v1474
    %1476 = vdwg.mxu0
    %v1477 = vmul.f32 %v1380, %v1455
    %v1478 = vmul.f32 %v1381, %v1457
    %v1479 = vmul.f32 %v1382, %v1461
    %v1480 = vmul.f32 %v1383, %v1463
    %v1481 = vmul.f32 %v1384, %v1467
    %v1482 = vmul.f32 %v1385, %v1469
    %v1483 = vmul.f32 %v1386, %v1473
    %v1484 = vmul.f32 %v1387, %v1475
    %v1485 = vadd.f32 %v1477, %v1479
    %v1486 = vadd.f32 %v1485, %v1481
    %v1487 = vadd.f32 %v1486, %v1483
    %v1488 = vrot.slane %v1487, 4
    %v1489 = vadd.f32 %v1487, %v1488
    %v1490 = vrot.slane %v1489, 2
    %v1491 = vadd.f32 %v1489, %v1490
    %v1492 = vrot.slane %v1491, 1
    %v1493 = vadd.f32 %v1491, %v1492
    %v1494 = vadd.f32 %v1478, %v1480
    %v1495 = vadd.f32 %v1494, %v1482
    %v1496 = vadd.f32 %v1495, %v1484
    %v1497 = vrot.slane %v1496, 4
    %v1498 = vadd.f32 %v1496, %v1497
    %v1499 = vrot.slane %v1498, 2
    %v1500 = vadd.f32 %v1498, %v1499
    %v1501 = vrot.slane %v1500, 1
    %v1502 = vadd.f32 %v1500, %v1501
    %vm1503 = vcmp.eq.s32.totalorder %v59, 5
    %v1504 = vsel %vm1503, %v1493, %v1269
    %v1505 = vsel %vm1503, %v1502, %v1270
    %s1506 = sadd.s32 0, 6
    %s1507 = sshra.s32 %s1506, 3
    %s1508 = sand.u32 %s1506, 7
    %s1509 = sshra.s32 %s1506, 3
    %s1510 = sand.u32 %s1506, 7
    %s1511 = smul.u32 %s1507, 4
    %s1512 = smul.u32 %s1511, 8
    %s1513 = sadd.s32 %s1512, %s1510
    %s1514 = scalar_lea.vmem [#allocation2], %s1513
    %v1515 = vld [vmem:[%s1514] ss:$8 sm:$0x3]
    %s1516 = sadd.s32 %s1511, 2
    %s1517 = smul.u32 %s1516, 8
    %s1518 = sadd.s32 %s1517, %s1510
    %s1519 = scalar_lea.vmem [#allocation2], %s1518
    %v1520 = vld [vmem:[%s1519] ss:$8 sm:$0x3]
    %v1522 = vlaneseq
    %v1523 = vshrl.u32 %v1522, 7
    %v1524 = vsub.s32 0, %v1523
    %v1525 = vrot.slane %v1515, %v1524
    %v1526 = vlaneseq
    %v1527 = vshrl.u32 %v1526, 7
    %v1528 = vsub.s32 1, %v1527
    %v1529 = vrot.slane %v1515, %v1528
    %v1532 = vmul.f32 %v1525, %v66
    %v1533 = vmul.f32 %v1529, %v67
    %v1534 = vmul.f32 %v1525, %v68
    %v1535 = vmul.f32 %v1529, %v69
    %v1536 = vmul.f32 %v1525, %v70
    %v1537 = vmul.f32 %v1529, %v71
    %v1538 = vmul.f32 %v1525, %v72
    %v1539 = vmul.f32 %v1529, %v73
    %v1540 = vsub.f32 %v1532, %v93
    %v1541 = vsub.f32 %v1533, %v94
    %v1542 = vsub.f32 %v1534, %v95
    %v1543 = vsub.f32 %v1535, %v96
    %v1544 = vsub.f32 %v1536, %v97
    %v1545 = vsub.f32 %v1537, %v98
    %v1546 = vsub.f32 %v1538, %v99
    %v1547 = vsub.f32 %v1539, %v100
    %v1548 = vand.u32 2147483647, %v1540
    %v1549 = vand.u32 2147483647, %v1541
    %v1550 = vand.u32 2147483647, %v1542
    %v1551 = vand.u32 2147483647, %v1543
    %v1552 = vand.u32 2147483647, %v1544
    %v1553 = vand.u32 2147483647, %v1545
    %v1554 = vand.u32 2147483647, %v1546
    %v1555 = vand.u32 2147483647, %v1547
    %v1556 = vsub.f32 1.0, %v1548
    %v1557 = vsub.f32 1.0, %v1549
    %v1558 = vsub.f32 1.0, %v1550
    %v1559 = vsub.f32 1.0, %v1551
    %v1560 = vsub.f32 1.0, %v1552
    %v1561 = vsub.f32 1.0, %v1553
    %v1562 = vsub.f32 1.0, %v1554
    %v1563 = vsub.f32 1.0, %v1555
    %v1564 = vmax.f32 %v1556, 0.0
    %v1565 = vmax.f32 %v1557, 0.0
    %v1566 = vmax.f32 %v1558, 0.0
    %v1567 = vmax.f32 %v1559, 0.0
    %v1568 = vmax.f32 %v1560, 0.0
    %v1569 = vmax.f32 %v1561, 0.0
    %v1570 = vmax.f32 %v1562, 0.0
    %v1571 = vmax.f32 %v1563, 0.0
    %v1573 = vlaneseq
    %v1574 = vshrl.u32 %v1573, 7
    %v1575 = vsub.s32 0, %v1574
    %v1576 = vrot.slane %v1520, %v1575
    %v1577 = vlaneseq
    %v1578 = vshrl.u32 %v1577, 7
    %v1579 = vsub.s32 1, %v1578
    %v1580 = vrot.slane %v1520, %v1579
    %v1583 = vmul.f32 %v1576, %v133
    %v1584 = vmul.f32 %v1580, %v134
    %v1585 = vmul.f32 %v1576, %v135
    %v1586 = vmul.f32 %v1580, %v136
    %v1587 = vmul.f32 %v1576, %v137
    %v1588 = vmul.f32 %v1580, %v138
    %v1589 = vmul.f32 %v1576, %v139
    %v1590 = vmul.f32 %v1580, %v140
    %v1591 = vsub.f32 %v1583, %v160
    %v1592 = vsub.f32 %v1584, %v161
    %v1593 = vsub.f32 %v1585, %v162
    %v1594 = vsub.f32 %v1586, %v163
    %v1595 = vsub.f32 %v1587, %v164
    %v1596 = vsub.f32 %v1588, %v165
    %v1597 = vsub.f32 %v1589, %v166
    %v1598 = vsub.f32 %v1590, %v167
    %v1599 = vand.u32 2147483647, %v1591
    %v1600 = vand.u32 2147483647, %v1592
    %v1601 = vand.u32 2147483647, %v1593
    %v1602 = vand.u32 2147483647, %v1594
    %v1603 = vand.u32 2147483647, %v1595
    %v1604 = vand.u32 2147483647, %v1596
    %v1605 = vand.u32 2147483647, %v1597
    %v1606 = vand.u32 2147483647, %v1598
    %v1607 = vsub.f32 1.0, %v1599
    %v1608 = vsub.f32 1.0, %v1600
    %v1609 = vsub.f32 1.0, %v1601
    %v1610 = vsub.f32 1.0, %v1602
    %v1611 = vsub.f32 1.0, %v1603
    %v1612 = vsub.f32 1.0, %v1604
    %v1613 = vsub.f32 1.0, %v1605
    %v1614 = vsub.f32 1.0, %v1606
    %v1615 = vmax.f32 %v1607, 0.0
    %v1616 = vmax.f32 %v1608, 0.0
    %v1617 = vmax.f32 %v1609, 0.0
    %v1618 = vmax.f32 %v1610, 0.0
    %v1619 = vmax.f32 %v1611, 0.0
    %v1620 = vmax.f32 %v1612, 0.0
    %v1621 = vmax.f32 %v1613, 0.0
    %v1622 = vmax.f32 %v1614, 0.0
    %1623 = vmatprep.subr.mxu0 0.0
    %1624 = vmatpush1.msra.mxu0 0.0
    %1625 = vmatprep.subr.mxu0 0.0
    %1626 = vmatpush1.msra.mxu0 0.0
    %1627 = vmatprep.subr.mxu0 0.0
    %1628 = vmatpush1.msra.mxu0 0.0
    %1629 = vmatprep.subr.mxu0 0.0
    %1630 = vmatpush1.msra.mxu0 0.0
    %1631 = vmatprep.subr.mxu0 0.0
    %1632 = vmatpush1.msra.mxu0 0.0
    %1633 = vmatprep.subr.mxu0 0.0
    %1634 = vmatpush1.msra.mxu0 0.0
    %1635 = vmatprep.subr.mxu0 0.0
    %1636 = vmatpush1.msra.mxu0 0.0
    %1637 = vmatprep.subr.mxu0 0.0
    %1638 = vmatpush1.msra.mxu0 0.0
    %1639 = vmatprep.subr.mxu0 0.0
    %1640 = vmatpush1.msra.mxu0 0.0
    %1641 = vmatprep.subr.mxu0 0.0
    %1642 = vmatpush1.msra.mxu0 0.0
    %1643 = vmatprep.subr.mxu0 0.0
    %1644 = vmatpush1.msra.mxu0 0.0
    %1645 = vmatprep.subr.mxu0 0.0
    %1646 = vmatpush1.msra.mxu0 0.0
    %1647 = vmatprep.subr.mxu0 %v1571
    %1648 = vmatpush1.msra.mxu0 %v1570
    %1649 = vmatprep.subr.mxu0 %v1569
    %1650 = vmatpush1.msra.mxu0 %v1568
    %1651 = vmatprep.subr.mxu0 %v1567
    %1652 = vmatpush1.msra.mxu0 %v1566
    %1653 = vmatprep.subr.mxu0 %v1565
    %1654 = vmatpush1.msra.mxu0 %v1564
    %1655 = vmatprep.subr.mxu0 0.0
    %1656 = vmatpush2.msra.mxu0 0.0
    %1657 = vmatprep.subr.mxu0 0.0
    %1658 = vmatpush2.msra.mxu0 0.0
    %1659 = vmatprep.subr.mxu0 0.0
    %1660 = vmatpush2.msra.mxu0 0.0
    %1661 = vmatprep.subr.mxu0 0.0
    %1662 = vmatpush2.msra.mxu0 0.0
    %1663 = vmatprep.subr.mxu0 0.0
    %1664 = vmatpush2.msra.mxu0 0.0
    %1665 = vmatprep.subr.mxu0 0.0
    %1666 = vmatpush2.msra.mxu0 0.0
    %1667 = vmatprep.subr.mxu0 0.0
    %1668 = vmatpush2.msra.mxu0 0.0
    %1669 = vmatprep.subr.mxu0 0.0
    %1670 = vmatpush2.msra.mxu0 0.0
    %1671 = vmatprep.subr.mxu0 0.0
    %1672 = vmatpush2.msra.mxu0 0.0
    %1673 = vmatprep.subr.mxu0 0.0
    %1674 = vmatpush2.msra.mxu0 0.0
    %1675 = vmatprep.subr.mxu0 0.0
    %1676 = vmatpush2.msra.mxu0 0.0
    %1677 = vmatprep.subr.mxu0 0.0
    %1678 = vmatpush2.msra.mxu0 0.0
    %1679 = vmatprep.subr.mxu0 0.0
    %1680 = vmatpush2.msra.mxu0 0.0
    %1681 = vmatprep.subr.mxu0 0.0
    %1682 = vmatpush2.msra.mxu0 0.0
    %1683 = vmatprep.subr.mxu0 0.0
    %1684 = vmatpush2.msra.mxu0 0.0
    %1685 = vmatprep.subr.mxu0 0.0
    %1686 = vmatpush2.msra.mxu0 0.0
    %1687 = vmatprep.mubr.f32.mxu0 0.0
    %1688 = vmatmul.mubr.f32.gmra.mxu0 %v202
    %v1689 = vpop.f32.mrf.mxu0
    %v1690 = vadd.f32 0.0, %v1689
    %v1691 = vpop.f32.mrf.mxu0
    %v1692 = vadd.f32 0.0, %v1691
    %1693 = vmatprep.mubr.f32.mxu0 0.0
    %1694 = vmatmul.mubr.f32.gmra.mxu0 %v205
    %v1695 = vpop.f32.mrf.mxu0
    %v1696 = vadd.f32 0.0, %v1695
    %v1697 = vpop.f32.mrf.mxu0
    %v1698 = vadd.f32 0.0, %v1697
    %1699 = vmatprep.mubr.f32.mxu0 0.0
    %1700 = vmatmul.mubr.f32.gmra.mxu0 %v208
    %v1701 = vpop.f32.mrf.mxu0
    %v1702 = vadd.f32 0.0, %v1701
    %v1703 = vpop.f32.mrf.mxu0
    %v1704 = vadd.f32 0.0, %v1703
    %1705 = vmatprep.mubr.f32.mxu0 0.0
    %1706 = vmatmul.mubr.f32.gmra.mxu0 %v211
    %v1707 = vpop.f32.mrf.mxu0
    %v1708 = vadd.f32 0.0, %v1707
    %v1709 = vpop.f32.mrf.mxu0
    %v1710 = vadd.f32 0.0, %v1709
    %1711 = vdwg.mxu0
    %v1712 = vmul.f32 %v1615, %v1690
    %v1713 = vmul.f32 %v1616, %v1692
    %v1714 = vmul.f32 %v1617, %v1696
    %v1715 = vmul.f32 %v1618, %v1698
    %v1716 = vmul.f32 %v1619, %v1702
    %v1717 = vmul.f32 %v1620, %v1704
    %v1718 = vmul.f32 %v1621, %v1708
    %v1719 = vmul.f32 %v1622, %v1710
    %v1720 = vadd.f32 %v1712, %v1714
    %v1721 = vadd.f32 %v1720, %v1716
    %v1722 = vadd.f32 %v1721, %v1718
    %v1723 = vrot.slane %v1722, 4
    %v1724 = vadd.f32 %v1722, %v1723
    %v1725 = vrot.slane %v1724, 2
    %v1726 = vadd.f32 %v1724, %v1725
    %v1727 = vrot.slane %v1726, 1
    %v1728 = vadd.f32 %v1726, %v1727
    %v1729 = vadd.f32 %v1713, %v1715
    %v1730 = vadd.f32 %v1729, %v1717
    %v1731 = vadd.f32 %v1730, %v1719
    %v1732 = vrot.slane %v1731, 4
    %v1733 = vadd.f32 %v1731, %v1732
    %v1734 = vrot.slane %v1733, 2
    %v1735 = vadd.f32 %v1733, %v1734
    %v1736 = vrot.slane %v1735, 1
    %v1737 = vadd.f32 %v1735, %v1736
    %vm1738 = vcmp.eq.s32.totalorder %v59, 6
    %v1739 = vsel %vm1738, %v1728, %v1504
    %v1740 = vsel %vm1738, %v1737, %v1505
    %s1741 = sadd.s32 0, 7
    %s1742 = sshra.s32 %s1741, 3
    %s1743 = sand.u32 %s1741, 7
    %s1744 = sshra.s32 %s1741, 3
    %s1745 = sand.u32 %s1741, 7
    %s1746 = smul.u32 %s1742, 4
    %s1747 = smul.u32 %s1746, 8
    %s1748 = sadd.s32 %s1747, %s1745
    %s1749 = scalar_lea.vmem [#allocation2], %s1748
    %v1750 = vld [vmem:[%s1749] ss:$8 sm:$0x3]
    %s1751 = sadd.s32 %s1746, 2
    %s1752 = smul.u32 %s1751, 8
    %s1753 = sadd.s32 %s1752, %s1745
    %s1754 = scalar_lea.vmem [#allocation2], %s1753
    %v1755 = vld [vmem:[%s1754] ss:$8 sm:$0x3]
    %v1757 = vlaneseq
    %v1758 = vshrl.u32 %v1757, 7
    %v1759 = vsub.s32 0, %v1758
    %v1760 = vrot.slane %v1750, %v1759
    %v1761 = vlaneseq
    %v1762 = vshrl.u32 %v1761, 7
    %v1763 = vsub.s32 1, %v1762
    %v1764 = vrot.slane %v1750, %v1763
    %v1767 = vmul.f32 %v1760, %v66
    %v1768 = vmul.f32 %v1764, %v67
    %v1769 = vmul.f32 %v1760, %v68
    %v1770 = vmul.f32 %v1764, %v69
    %v1771 = vmul.f32 %v1760, %v70
    %v1772 = vmul.f32 %v1764, %v71
    %v1773 = vmul.f32 %v1760, %v72
    %v1774 = vmul.f32 %v1764, %v73
    %v1775 = vsub.f32 %v1767, %v93
    %v1776 = vsub.f32 %v1768, %v94
    %v1777 = vsub.f32 %v1769, %v95
    %v1778 = vsub.f32 %v1770, %v96
    %v1779 = vsub.f32 %v1771, %v97
    %v1780 = vsub.f32 %v1772, %v98
    %v1781 = vsub.f32 %v1773, %v99
    %v1782 = vsub.f32 %v1774, %v100
    %v1783 = vand.u32 2147483647, %v1775
    %v1784 = vand.u32 2147483647, %v1776
    %v1785 = vand.u32 2147483647, %v1777
    %v1786 = vand.u32 2147483647, %v1778
    %v1787 = vand.u32 2147483647, %v1779
    %v1788 = vand.u32 2147483647, %v1780
    %v1789 = vand.u32 2147483647, %v1781
    %v1790 = vand.u32 2147483647, %v1782
    %v1791 = vsub.f32 1.0, %v1783
    %v1792 = vsub.f32 1.0, %v1784
    %v1793 = vsub.f32 1.0, %v1785
    %v1794 = vsub.f32 1.0, %v1786
    %v1795 = vsub.f32 1.0, %v1787
    %v1796 = vsub.f32 1.0, %v1788
    %v1797 = vsub.f32 1.0, %v1789
    %v1798 = vsub.f32 1.0, %v1790
    %v1799 = vmax.f32 %v1791, 0.0
    %v1800 = vmax.f32 %v1792, 0.0
    %v1801 = vmax.f32 %v1793, 0.0
    %v1802 = vmax.f32 %v1794, 0.0
    %v1803 = vmax.f32 %v1795, 0.0
    %v1804 = vmax.f32 %v1796, 0.0
    %v1805 = vmax.f32 %v1797, 0.0
    %v1806 = vmax.f32 %v1798, 0.0
    %v1808 = vlaneseq
    %v1809 = vshrl.u32 %v1808, 7
    %v1810 = vsub.s32 0, %v1809
    %v1811 = vrot.slane %v1755, %v1810
    %v1812 = vlaneseq
    %v1813 = vshrl.u32 %v1812, 7
    %v1814 = vsub.s32 1, %v1813
    %v1815 = vrot.slane %v1755, %v1814
    %v1818 = vmul.f32 %v1811, %v133
    %v1819 = vmul.f32 %v1815, %v134
    %v1820 = vmul.f32 %v1811, %v135
    %v1821 = vmul.f32 %v1815, %v136
    %v1822 = vmul.f32 %v1811, %v137
    %v1823 = vmul.f32 %v1815, %v138
    %v1824 = vmul.f32 %v1811, %v139
    %v1825 = vmul.f32 %v1815, %v140
    %v1826 = vsub.f32 %v1818, %v160
    %v1827 = vsub.f32 %v1819, %v161
    %v1828 = vsub.f32 %v1820, %v162
    %v1829 = vsub.f32 %v1821, %v163
    %v1830 = vsub.f32 %v1822, %v164
    %v1831 = vsub.f32 %v1823, %v165
    %v1832 = vsub.f32 %v1824, %v166
    %v1833 = vsub.f32 %v1825, %v167
    %v1834 = vand.u32 2147483647, %v1826
    %v1835 = vand.u32 2147483647, %v1827
    %v1836 = vand.u32 2147483647, %v1828
    %v1837 = vand.u32 2147483647, %v1829
    %v1838 = vand.u32 2147483647, %v1830
    %v1839 = vand.u32 2147483647, %v1831
    %v1840 = vand.u32 2147483647, %v1832
    %v1841 = vand.u32 2147483647, %v1833
    %v1842 = vsub.f32 1.0, %v1834
    %v1843 = vsub.f32 1.0, %v1835
    %v1844 = vsub.f32 1.0, %v1836
    %v1845 = vsub.f32 1.0, %v1837
    %v1846 = vsub.f32 1.0, %v1838
    %v1847 = vsub.f32 1.0, %v1839
    %v1848 = vsub.f32 1.0, %v1840
    %v1849 = vsub.f32 1.0, %v1841
    %v1850 = vmax.f32 %v1842, 0.0
    %v1851 = vmax.f32 %v1843, 0.0
    %v1852 = vmax.f32 %v1844, 0.0
    %v1853 = vmax.f32 %v1845, 0.0
    %v1854 = vmax.f32 %v1846, 0.0
    %v1855 = vmax.f32 %v1847, 0.0
    %v1856 = vmax.f32 %v1848, 0.0
    %v1857 = vmax.f32 %v1849, 0.0
    %1858 = vmatprep.subr.mxu0 0.0
    %1859 = vmatpush1.msra.mxu0 0.0
    %1860 = vmatprep.subr.mxu0 0.0
    %1861 = vmatpush1.msra.mxu0 0.0
    %1862 = vmatprep.subr.mxu0 0.0
    %1863 = vmatpush1.msra.mxu0 0.0
    %1864 = vmatprep.subr.mxu0 0.0
    %1865 = vmatpush1.msra.mxu0 0.0
    %1866 = vmatprep.subr.mxu0 0.0
    %1867 = vmatpush1.msra.mxu0 0.0
    %1868 = vmatprep.subr.mxu0 0.0
    %1869 = vmatpush1.msra.mxu0 0.0
    %1870 = vmatprep.subr.mxu0 0.0
    %1871 = vmatpush1.msra.mxu0 0.0
    %1872 = vmatprep.subr.mxu0 0.0
    %1873 = vmatpush1.msra.mxu0 0.0
    %1874 = vmatprep.subr.mxu0 0.0
    %1875 = vmatpush1.msra.mxu0 0.0
    %1876 = vmatprep.subr.mxu0 0.0
    %1877 = vmatpush1.msra.mxu0 0.0
    %1878 = vmatprep.subr.mxu0 0.0
    %1879 = vmatpush1.msra.mxu0 0.0
    %1880 = vmatprep.subr.mxu0 0.0
    %1881 = vmatpush1.msra.mxu0 0.0
    %1882 = vmatprep.subr.mxu0 %v1806
    %1883 = vmatpush1.msra.mxu0 %v1805
    %1884 = vmatprep.subr.mxu0 %v1804
    %1885 = vmatpush1.msra.mxu0 %v1803
    %1886 = vmatprep.subr.mxu0 %v1802
    %1887 = vmatpush1.msra.mxu0 %v1801
    %1888 = vmatprep.subr.mxu0 %v1800
    %1889 = vmatpush1.msra.mxu0 %v1799
    %1890 = vmatprep.subr.mxu0 0.0
    %1891 = vmatpush2.msra.mxu0 0.0
    %1892 = vmatprep.subr.mxu0 0.0
    %1893 = vmatpush2.msra.mxu0 0.0
    %1894 = vmatprep.subr.mxu0 0.0
    %1895 = vmatpush2.msra.mxu0 0.0
    %1896 = vmatprep.subr.mxu0 0.0
    %1897 = vmatpush2.msra.mxu0 0.0
    %1898 = vmatprep.subr.mxu0 0.0
    %1899 = vmatpush2.msra.mxu0 0.0
    %1900 = vmatprep.subr.mxu0 0.0
    %1901 = vmatpush2.msra.mxu0 0.0
    %1902 = vmatprep.subr.mxu0 0.0
    %1903 = vmatpush2.msra.mxu0 0.0
    %1904 = vmatprep.subr.mxu0 0.0
    %1905 = vmatpush2.msra.mxu0 0.0
    %1906 = vmatprep.subr.mxu0 0.0
    %1907 = vmatpush2.msra.mxu0 0.0
    %1908 = vmatprep.subr.mxu0 0.0
    %1909 = vmatpush2.msra.mxu0 0.0
    %1910 = vmatprep.subr.mxu0 0.0
    %1911 = vmatpush2.msra.mxu0 0.0
    %1912 = vmatprep.subr.mxu0 0.0
    %1913 = vmatpush2.msra.mxu0 0.0
    %1914 = vmatprep.subr.mxu0 0.0
    %1915 = vmatpush2.msra.mxu0 0.0
    %1916 = vmatprep.subr.mxu0 0.0
    %1917 = vmatpush2.msra.mxu0 0.0
    %1918 = vmatprep.subr.mxu0 0.0
    %1919 = vmatpush2.msra.mxu0 0.0
    %1920 = vmatprep.subr.mxu0 0.0
    %1921 = vmatpush2.msra.mxu0 0.0
    %1922 = vmatprep.mubr.f32.mxu0 0.0
    %1923 = vmatmul.mubr.f32.gmra.mxu0 %v202
    %v1924 = vpop.f32.mrf.mxu0
    %v1925 = vadd.f32 0.0, %v1924
    %v1926 = vpop.f32.mrf.mxu0
    %v1927 = vadd.f32 0.0, %v1926
    %1928 = vmatprep.mubr.f32.mxu0 0.0
    %1929 = vmatmul.mubr.f32.gmra.mxu0 %v205
    %v1930 = vpop.f32.mrf.mxu0
    %v1931 = vadd.f32 0.0, %v1930
    %v1932 = vpop.f32.mrf.mxu0
    %v1933 = vadd.f32 0.0, %v1932
    %1934 = vmatprep.mubr.f32.mxu0 0.0
    %1935 = vmatmul.mubr.f32.gmra.mxu0 %v208
    %v1936 = vpop.f32.mrf.mxu0
    %v1937 = vadd.f32 0.0, %v1936
    %v1938 = vpop.f32.mrf.mxu0
    %v1939 = vadd.f32 0.0, %v1938
    %1940 = vmatprep.mubr.f32.mxu0 0.0
    %1941 = vmatmul.mubr.f32.gmra.mxu0 %v211
    %v1942 = vpop.f32.mrf.mxu0
    %v1943 = vadd.f32 0.0, %v1942
    %v1944 = vpop.f32.mrf.mxu0
    %v1945 = vadd.f32 0.0, %v1944
    %1946 = vdwg.mxu0
    %v1947 = vmul.f32 %v1850, %v1925
    %v1948 = vmul.f32 %v1851, %v1927
    %v1949 = vmul.f32 %v1852, %v1931
    %v1950 = vmul.f32 %v1853, %v1933
    %v1951 = vmul.f32 %v1854, %v1937
    %v1952 = vmul.f32 %v1855, %v1939
    %v1953 = vmul.f32 %v1856, %v1943
    %v1954 = vmul.f32 %v1857, %v1945
    %v1955 = vadd.f32 %v1947, %v1949
    %v1956 = vadd.f32 %v1955, %v1951
    %v1957 = vadd.f32 %v1956, %v1953
    %v1958 = vrot.slane %v1957, 4
    %v1959 = vadd.f32 %v1957, %v1958
    %v1960 = vrot.slane %v1959, 2
    %v1961 = vadd.f32 %v1959, %v1960
    %v1962 = vrot.slane %v1961, 1
    %v1963 = vadd.f32 %v1961, %v1962
    %v1964 = vadd.f32 %v1948, %v1950
    %v1965 = vadd.f32 %v1964, %v1952
    %v1966 = vadd.f32 %v1965, %v1954
    %v1967 = vrot.slane %v1966, 4
    %v1968 = vadd.f32 %v1966, %v1967
    %v1969 = vrot.slane %v1968, 2
    %v1970 = vadd.f32 %v1968, %v1969
    %v1971 = vrot.slane %v1970, 1
    %v1972 = vadd.f32 %v1970, %v1971
    %vm1973 = vcmp.eq.s32.totalorder %v59, 7
    %v1974 = vsel %vm1973, %v1963, %v1739
    %v1975 = vsel %vm1973, %v1972, %v1740
    %s1976 = smul.u32 0, 2
    %s1977 = smul.addr %s1976, 8
    %s1978 = scalar_lea.vmem [#allocation8], %s1977
    %1979 = vst [vmem:[%s1978] sm:$0xff] %v1974
    %1980 = vst [vmem:[%s1978 + $0x8] sm:$0xff] %v1975
    // Predicated region
    $region26: #{tpu_custom_call.1} parent=1 // pred_check
      _
    $region27: #{tpu_custom_call.1} parent=1 // pred_check_branch
      %1982 = sbr.rel (0) target = $region29
    $region28: #{tpu_custom_call.1} parent=1 // pred_region
      %s1984 = ssub.s32 256, 256
      %1985 = vsyncadd [#allocation4], %s1984
      %s1987 = sshll.u32 [#allocation8], 4
      %s1988 = int_to_ptr.vmem [resolvable:$true] %s1987
      %1990 = dma.vmem_to_hbm [thread:$0]  %s1988, 256, %s3, [#allocation4]
    $region29: #{tpu_custom_call.1} parent=1 // pred_fallthru
      _
    // Predicated region
    $region30: #{tpu_custom_call.1} parent=1 // pred_check
      _
    $region31: #{tpu_custom_call.1} parent=1 // pred_check_branch
      %1992 = sbr.rel (0) target = $region33
    $region32: #{tpu_custom_call.1} parent=1 // pred_region
      %1993 = dma.done [#allocation4], 256
    $region33: #{tpu_custom_call.1} parent=1 // pred_fallthru
      _
    %1994 = vsyncpa [#allocation3], 1
    %1995 = vsyncpa [#allocation6], 1
    %1996 = vsyncpa [#allocation4], 1

</llo_original>
